<compile_context>
chip_gen: v6e
topology: v6e:2x2x1
jax: 0.10.0
libtpu: 0.0.40
codegen_flags: <defaults>
</compile_context>

<pallas_src>
import math

import jax
import jax.numpy as jnp
from jax.experimental import pallas as pl
from jax.experimental.pallas import tpu as pltpu


_SQRT_2_OVER_PI = math.sqrt(2.0 / math.pi)


def _gelu_tanh(x):
    return 0.5 * x * (1.0 + jnp.tanh(_SQRT_2_OVER_PI * (x + 0.044715 * x * x * x)))


def _round_up(x, m):
    return ((x + m - 1) // m) * m


def _vmem_capacity_bytes():
    """Physical VMEM per TensorCore (128 MiB v5e/v6e, 64 MiB v7x)."""
    try:
        cap = int(pltpu.get_tpu_info().vmem_capacity_bytes)
        if cap > 0:
            return cap
    except Exception:
        pass
    return 64 * 1024 * 1024  # conservative default (v7x per-TC)


def _spec(block_shape, index_map, buffer_count=None):
    """BlockSpec with explicit pipeline buffer depth; falls back to the default
    double-buffering if this Pallas version doesn't expose pipeline_mode/Buffered."""
    if buffer_count is not None:
        try:
            return pl.BlockSpec(block_shape, index_map,
                                pipeline_mode=pl.Buffered(buffer_count))
        except Exception:
            pass
    return pl.BlockSpec(block_shape, index_map)


# ----------------------------------------------------------------------------- kernels
def ffn_resident_kernel(x_ref, w1_ref, b1_ref, w2_ref, b2_ref, o_ref):
    # x_ref: (tm, H) native dtype;  w1_ref: (H, I) bf16;  b1_ref: (1, I) f32
    # w2_ref: (I, H) bf16;          b2_ref: (1, H) f32;   o_ref: (tm, H)
    x = x_ref[...].astype(w1_ref.dtype)                  # cast after load (in VMEM)
    h = jnp.dot(x, w1_ref[...], preferred_element_type=jnp.float32)
    g = _gelu_tanh(h + b1_ref[...])                      # bias + gelu in f32
    # dropout == identity (eval mode)
    y = jnp.dot(g.astype(w2_ref.dtype), w2_ref[...],
                preferred_element_type=jnp.float32)
    o_ref[...] = (y + b2_ref[...]).astype(o_ref.dtype)


def ffn_streamed_kernel(x_ref, w1_ref, b1_ref, w2_ref, b2_ref, o_ref, acc_ref):
    # Fallback when W1/W2 do not fit VMEM: stream I-slabs, resident f32 accumulator.
    k = pl.program_id(1)

    @pl.when(k == 0)
    def _init():
        acc_ref[...] = jnp.zeros_like(acc_ref)

    x = x_ref[...].astype(w1_ref.dtype)
    h = jnp.dot(x, w1_ref[...], preferred_element_type=jnp.float32)
    g = _gelu_tanh(h + b1_ref[...])
    # dropout == identity (eval mode)
    acc_ref[...] += jnp.dot(g.astype(w2_ref.dtype), w2_ref[...],
                            preferred_element_type=jnp.float32)

    @pl.when(k == pl.num_programs(1) - 1)
    def _finalize():
        o_ref[...] = (acc_ref[...] + b2_ref[...]).astype(o_ref.dtype)


# ----------------------------------------------------------------------------- wrapper
def prepare_ffn_params(w1, b1, w2, b2):
    """One-time dtype/layout conversion (hoisted out of the per-call hot path)."""
    H, I = w1.shape
    return (jnp.asarray(w1, jnp.bfloat16),
            jnp.asarray(b1, jnp.float32).reshape(1, I),
            jnp.asarray(w2, jnp.bfloat16),
            jnp.asarray(b2, jnp.float32).reshape(1, H))


def positionwise_ffn(x, w1, b1, w2, b2, *, tm=None, ti=None):
    """y = dropout(gelu(x @ w1 + b1)) @ w2 + b2 with dropout == identity (eval).

    x: (..., H); w1: (H, I); b1: (I,)/(1, I); w2: (I, H); b2: (H,)/(1, H).
    Pass weights through prepare_ffn_params() once at setup so no per-call cast
    pass touches HBM (the conversions below are then no-ops).
    """
    orig_shape = x.shape
    H = orig_shape[-1]
    I = w1.shape[-1]
    M = math.prod(orig_shape[:-1]) if len(orig_shape) > 1 else 1

    out_dtype = x.dtype
    x_isz = jnp.dtype(x.dtype).itemsize
    o_isz = jnp.dtype(out_dtype).itemsize

    # No-ops if prepare_ffn_params() was already applied.
    w1b = jnp.asarray(w1, jnp.bfloat16)
    w2b = jnp.asarray(w2, jnp.bfloat16)
    b1f = jnp.asarray(b1, jnp.float32).reshape(1, I)
    b2f = jnp.asarray(b2, jnp.float32).reshape(1, H)

    # ---- per-generation VMEM budget (128 MiB v5e/v6e, 64 MiB v7x) -------------------
    capacity = _vmem_capacity_bytes()
    budget = int(capacity * 0.75)                 # ~25% headroom for compiler scratch

    def resident_footprint(tm_):
        return ((H * I + I * H) * 2                                      # resident bf16 weights
                + 8 * _round_up(I, 128) * 4 + 8 * _round_up(H, 128) * 4  # biases (f32)
                + 2 * tm_ * H * (x_isz + o_isz)                          # double-buffered x/out
                + tm_ * I * 6 + tm_ * H * 4)                             # live h(f32)+g(bf16)+y(f32)

    def streamed_footprint(tm_, ti_):
        return (3 * (H * ti_ + ti_ * H) * 2                              # Buffered(3) weight slabs
                + 2 * 8 * _round_up(ti_, 128) * 4 + 2 * 8 * _round_up(H, 128) * 4
                + 2 * tm_ * H * (x_isz + o_isz)
                + tm_ * H * 4                                            # f32 accumulator
                + tm_ * ti_ * 6 + tm_ * H * 4)                           # live temporaries

    # ---- pick execution plan + tiles -------------------------------------------------
    tm_cands = [c for c in (1024, 768, 512, 384, 256, 128, 64, 32, 16, 8)
                if c <= max(8, _round_up(M, 8))]

    plan = None
    ti_eff = I
    if tm is not None:
        tm_eff = max(8, _round_up(int(tm), 8))
        plan = "resident" if resident_footprint(tm_eff) <= budget else None
    else:
        tm_eff = next((c for c in tm_cands if resident_footprint(c) <= budget), None)
        if tm_eff is not None:
            plan = "resident"

    if plan != "resident":
        plan = "streamed"
        if ti is not None and I % int(ti) == 0:
            ti_eff = int(ti)
        else:
            ti_eff = next((c for c in (512, 256, 1024, 768, 128) if I % c == 0), I)
        if tm is None or tm_eff is None:
            tm_eff = next((c for c in tm_cands
                           if streamed_footprint(c, ti_eff) <= budget), 8)

    # ---- pad rows so the row tile divides M ------------------------------------------
    Mp = _round_up(M, tm_eff)
    x2d = x.reshape(M, H)
    if Mp != M:
        x2d = jnp.pad(x2d, ((0, Mp - M), (0, 0)))
    n_row_tiles = Mp // tm_eff

    if plan == "resident":
        grid = (n_row_tiles,)
        in_specs = [
            pl.BlockSpec((tm_eff, H), lambda i: (i, 0)),            # x row tile
            _spec((H, I), lambda i: (0, 0), buffer_count=1),        # W1 resident, single-buffered
            _spec((1, I), lambda i: (0, 0), buffer_count=1),        # b1 resident
            _spec((I, H), lambda i: (0, 0), buffer_count=1),        # W2 resident
            _spec((1, H), lambda i: (0, 0), buffer_count=1),        # b2 resident
        ]
        out_specs = pl.BlockSpec((tm_eff, H), lambda i: (i, 0))
        scratch_shapes = []
        kernel = ffn_resident_kernel
        dim_semantics = ("parallel",)
        footprint = resident_footprint(tm_eff)
        weight_read_mult = 1
    else:
        grid = (n_row_tiles, I // ti_eff)
        in_specs = [
            pl.BlockSpec((tm_eff, H), lambda i, k: (i, 0)),                 # x row tile
            _spec((H, ti_eff), lambda i, k: (0, k), buffer_count=3),        # W1 I-slab
            pl.BlockSpec((1, ti_eff), lambda i, k: (0, k)),                 # b1 I-slab
            _spec((ti_eff, H), lambda i, k: (k, 0), buffer_count=3),        # W2 I-slab
            pl.BlockSpec((1, H), lambda i, k: (0, 0)),                      # b2 (finalize only)
        ]
        out_specs = pl.BlockSpec((tm_eff, H), lambda i, k: (i, 0))
        scratch_shapes = [pltpu.VMEM((tm_eff, H), jnp.float32)]
        kernel = ffn_streamed_kernel
        dim_semantics = ("parallel", "arbitrary")
        footprint = streamed_footprint(tm_eff, ti_eff)
        weight_read_mult = n_row_tiles                    # weights re-streamed per row tile

    vmem_limit = int(max(32 * 1024 * 1024, min(budget, 2 * footprint)))

    cost = pl.CostEstimate(
        flops=4 * Mp * H * I,                                   # two matmuls
        transcendentals=Mp * I,                                 # tanh in gelu
        bytes_accessed=(Mp * H * x_isz                          # x read (native dtype)
                        + weight_read_mult * (H * I + I * H) * 2  # bf16 weights
                        + I * 4 + H * 4                         # biases
                        + Mp * H * o_isz),                      # output write
    )

    out2d = pl.pallas_call(
        kernel,
        out_shape=jax.ShapeDtypeStruct((Mp, H), out_dtype),
        grid_spec=pltpu.PrefetchScalarGridSpec(
            num_scalar_prefetch=0,
            grid=grid,
            in_specs=in_specs,
            out_specs=out_specs,
            scratch_shapes=scratch_shapes,
        ),
        compiler_params=pltpu.CompilerParams(
            dimension_semantics=dim_semantics,
            vmem_limit_bytes=vmem_limit,
        ),
        cost_estimate=cost,
    )(x2d, w1b, b1f, w2b, b2f)

    if Mp != M:
        out2d = out2d[:M]
    return out2d.reshape(orig_shape)


# ----------------------------------------------------------------------------- reference
def ffn_reference(x, w1, b1, w2, b2):
    h = jnp.einsum("bsh,hi->bsi", x, w1) + b1
    g = _gelu_tanh(h)
    return jnp.einsum("bsi,ih->bsh", g, w2) + b2


if __name__ == "__main__":
    # Small BERT-like config with lane-dense dims: hidden=128, intermediate=512,
    # batch=2, seq=128  ->  M = 256 rows.
    B, S, H, I = 2, 128, 128, 512

    key = jax.random.PRNGKey(0)
    kx, k1, k2, k3, k4 = jax.random.split(key, 5)

    x = jax.random.normal(kx, (B, S, H), dtype=jnp.float32)
    # Deterministic parameter init (Linear weights stored as (in, out)).
    w1 = jax.random.normal(k1, (H, I), dtype=jnp.float32) * 0.02
    b1 = jax.random.normal(k2, (I,), dtype=jnp.float32) * 0.02
    w2 = jax.random.normal(k3, (I, H), dtype=jnp.float32) * 0.02
    b2 = jax.random.normal(k4, (H,), dtype=jnp.float32) * 0.02

    # One-time parameter conversion, hoisted out of the hot path.
    params = prepare_ffn_params(w1, b1, w2, b2)

    out = positionwise_ffn(x, *params)
    out = jax.block_until_ready(out)

    ref = ffn_reference(x, w1, b1, w2, b2)
    assert out.shape == (B, S, H)
    # bf16 MXU operands (f32 accumulation) vs f32 reference -> modest tolerance.
    err = float(jnp.max(jnp.abs(out - ref)))
    assert jnp.allclose(out, ref, atol=2e-2, rtol=2e-2), err

    print("KERNEL_OK")
</pallas_src>

<mosaic_0001>
module attributes {stable_mosaic.version = 11 : i64} {
  func.func @ffn_resident_kernel(%arg0: i32, %arg1: memref<256x128xf32, #tpu.memory_space<vmem>>, %arg2: memref<128x512xbf16, #tpu.memory_space<vmem>>, %arg3: memref<1x512xf32, #tpu.memory_space<vmem>>, %arg4: memref<512x128xbf16, #tpu.memory_space<vmem>>, %arg5: memref<1x128xf32, #tpu.memory_space<vmem>>, %arg6: memref<256x128xf32, #tpu.memory_space<vmem>>) attributes {dimension_semantics = [#tpu.dimension_semantics<parallel>], iteration_bounds = array<i64: 1>, scalar_prefetch = 0 : i64, scratch_operands = 0 : i64, tpu.core_type = #tpu.core_type<tc>, window_params = [{transform_indices = @transform_0, window_bounds = array<i64: 256, 128>}, {pipeline_mode = #tpu.pipeline_mode<synchronous>, transform_indices = @transform_1, window_bounds = array<i64: 128, 512>}, {pipeline_mode = #tpu.pipeline_mode<synchronous>, transform_indices = @transform_2, window_bounds = array<i64: 1, 512>}, {pipeline_mode = #tpu.pipeline_mode<synchronous>, transform_indices = @transform_3, window_bounds = array<i64: 512, 128>}, {pipeline_mode = #tpu.pipeline_mode<synchronous>, transform_indices = @transform_4, window_bounds = array<i64: 1, 128>}, {transform_indices = @transform_5, window_bounds = array<i64: 256, 128>}]} {
    %c0 = arith.constant 0 : index
    %c0_0 = arith.constant 0 : index
    %0 = vector.load %arg1[%c0, %c0_0] : memref<256x128xf32, #tpu.memory_space<vmem>>, vector<256x128xf32>
    %1 = arith.truncf %0 : vector<256x128xf32> to vector<256x128xbf16>
    %c0_1 = arith.constant 0 : index
    %c0_2 = arith.constant 0 : index
    %2 = vector.load %arg2[%c0_1, %c0_2] : memref<128x512xbf16, #tpu.memory_space<vmem>>, vector<128x512xbf16>
    %cst = arith.constant dense<0.000000e+00> : vector<256x512xf32>
    %3 = tpu.matmul %1, %2, %cst {dimension_numbers = #tpu.dot_dimension_numbers<[1], [0], [0], [1], [0, 0, 1, 1], [], []>} : vector<256x128xbf16>, vector<128x512xbf16>, vector<256x512xf32> -> vector<256x512xf32>
    %c0_3 = arith.constant 0 : index
    %c0_4 = arith.constant 0 : index
    %4 = vector.load %arg3[%c0_3, %c0_4] : memref<1x512xf32, #tpu.memory_space<vmem>>, vector<1x512xf32>
    %5 = vector.broadcast %4 : vector<1x512xf32> to vector<256x512xf32>
    %6 = arith.addf %3, %5 : vector<256x512xf32>
    %cst_5 = arith.constant 5.000000e-01 : f32
    %7 = vector.broadcast %cst_5 : f32 to vector<256x512xf32>
    %8 = arith.mulf %7, %6 : vector<256x512xf32>
    %cst_6 = arith.constant 4.471500e-02 : f32
    %9 = vector.broadcast %cst_6 : f32 to vector<256x512xf32>
    %10 = arith.mulf %9, %6 : vector<256x512xf32>
    %11 = arith.mulf %10, %6 : vector<256x512xf32>
    %12 = arith.mulf %11, %6 : vector<256x512xf32>
    %13 = arith.addf %6, %12 : vector<256x512xf32>
    %cst_7 = arith.constant 0.797884583 : f32
    %14 = vector.broadcast %cst_7 : f32 to vector<256x512xf32>
    %15 = arith.mulf %14, %13 : vector<256x512xf32>
    %16 = math.tanh %15 : vector<256x512xf32>
    %cst_8 = arith.constant 1.000000e+00 : f32
    %17 = vector.broadcast %cst_8 : f32 to vector<256x512xf32>
    %18 = arith.addf %17, %16 : vector<256x512xf32>
    %19 = arith.mulf %8, %18 : vector<256x512xf32>
    %20 = arith.truncf %19 : vector<256x512xf32> to vector<256x512xbf16>
    %c0_9 = arith.constant 0 : index
    %c0_10 = arith.constant 0 : index
    %21 = vector.load %arg4[%c0_9, %c0_10] : memref<512x128xbf16, #tpu.memory_space<vmem>>, vector<512x128xbf16>
    %cst_11 = arith.constant dense<0.000000e+00> : vector<256x128xf32>
    %22 = tpu.matmul %20, %21, %cst_11 {dimension_numbers = #tpu.dot_dimension_numbers<[1], [0], [0], [1], [0, 0, 1, 1], [], []>} : vector<256x512xbf16>, vector<512x128xbf16>, vector<256x128xf32> -> vector<256x128xf32>
    %c0_12 = arith.constant 0 : index
    %c0_13 = arith.constant 0 : index
    %23 = vector.load %arg5[%c0_12, %c0_13] : memref<1x128xf32, #tpu.memory_space<vmem>>, vector<1x128xf32>
    %24 = vector.broadcast %23 : vector<1x128xf32> to vector<256x128xf32>
    %25 = arith.addf %22, %24 : vector<256x128xf32>
    %c0_14 = arith.constant 0 : index
    %c0_15 = arith.constant 0 : index
    %26 = vector.load %arg6[%c0_14, %c0_15] : memref<256x128xf32, #tpu.memory_space<vmem>>, vector<256x128xf32>
    tpu.vector_store %arg6[%c0_14, %c0_15], %25 {strides = array<i32>} : memref<256x128xf32, #tpu.memory_space<vmem>>, vector<256x128xf32>,
    return
  }
  func.func @transform_0(%arg0: i32) -> (i32, i32) {
    %c0_i32 = arith.constant 0 : i32
    %c0_i32_0 = arith.constant 0 : i32
    return %arg0, %c0_i32 : i32, i32
  }
  func.func @transform_1(%arg0: i32) -> (i32, i32) {
    %c0_i32 = arith.constant 0 : i32
    %c0_i32_0 = arith.constant 0 : i32
    %c0_i32_1 = arith.constant 0 : i32
    return %c0_i32, %c0_i32_0 : i32, i32
  }
  func.func @transform_2(%arg0: i32) -> (i32, i32) {
    %c0_i32 = arith.constant 0 : i32
    %c0_i32_0 = arith.constant 0 : i32
    %c0_i32_1 = arith.constant 0 : i32
    return %c0_i32, %c0_i32_0 : i32, i32
  }
  func.func @transform_3(%arg0: i32) -> (i32, i32) {
    %c0_i32 = arith.constant 0 : i32
    %c0_i32_0 = arith.constant 0 : i32
    %c0_i32_1 = arith.constant 0 : i32
    return %c0_i32, %c0_i32_0 : i32, i32
  }
  func.func @transform_4(%arg0: i32) -> (i32, i32) {
    %c0_i32 = arith.constant 0 : i32
    %c0_i32_0 = arith.constant 0 : i32
    %c0_i32_1 = arith.constant 0 : i32
    return %c0_i32, %c0_i32_0 : i32, i32
  }
  func.func @transform_5(%arg0: i32) -> (i32, i32) {
    %c0_i32 = arith.constant 0 : i32
    %c0_i32_0 = arith.constant 0 : i32
    return %arg0, %c0_i32 : i32, i32
  }
}

</mosaic_0001>

<llo_original>
// kernel: tpu_custom_call.1
$region0: #{tpu_custom_call.1}
  #allocation0 [shape = 'u32[]', space=smem, size = 0x4, offset = 0x4, fixed_abs, tag = 'smem constant byte address 0x4 - core index']
  #allocation1 [shape = 'u32[144,128]{1,0:T(1,128)}', space=vmem, size = 0x12000, scoped, tag = 'internal scratch']
  %s0 = inlined_call_operand.hbm [shape: f32[256,128], index: 0, kind: input, shape index: {}]
  %s1 = inlined_call_operand.hbm [shape: bf16[128,512], index: 1, kind: input, shape index: {}]
  %s2 = inlined_call_operand.hbm [shape: f32[1,512], index: 2, kind: input, shape index: {}]
  %s3 = inlined_call_operand.hbm [shape: bf16[512,128], index: 3, kind: input, shape index: {}]
  %s4 = inlined_call_operand.vmem [shape: f32[1,128], index: 4, kind: input, shape index: {}]
  %s5 = inlined_call_operand.hbm [shape: f32[256,128], index: 5, kind: output, shape index: {}]
  %s6 = sld [smem:[#allocation0]]
  $region46: #{tpu_custom_call.1} parent=0
    _
  %s8 = ssub.s32 1, %s6
  %s9 = scalar_select 0, %s8, %s6
  $region1: #{tpu_custom_call.1} parent=0
    #allocation2 [shape = 'u8[131072]{0}', space=vmem, size = 0x20000, scoped, tag = 'input window, operand 0, single buffered']
    #allocation3 [shape = 's32[1]{0}', space=sflag, size = 0x4, scoped, tag = 'scoped memory for tpu_custom_call.1']
    #allocation4 [shape = 's32[1]{0}', space=sflag, size = 0x4, scoped, tag = 'scoped memory for tpu_custom_call.1']
    #allocation5 [shape = 'u8[131072]{0}', space=vmem, size = 0x20000, scoped, tag = 'input window, operand 1, single buffered']
    #allocation6 [shape = 's32[1]{0}', space=sflag, size = 0x4, scoped, tag = 'scoped memory for tpu_custom_call.1']
    #allocation7 [shape = 'u8[2048]{0}', space=vmem, size = 0x800, scoped, tag = 'input window, operand 2, single buffered']
    #allocation8 [shape = 'u8[131072]{0}', space=vmem, size = 0x20000, scoped, tag = 'input window, operand 3, single buffered']
    #allocation9 [shape = 's32[1]{0}', space=sflag, size = 0x4, scoped, tag = 'scoped memory for tpu_custom_call.1']
    #allocation10 [shape = 'u8[131072]{0}', space=vmem, size = 0x20000, scoped, tag = 'output window, operand 0, single buffered']
    %10 = vsyncpa [#allocation3], 0
    %11 = vsyncpa [#allocation6], 0
    %12 = vsyncpa [#allocation9], 0
    %13 = vsyncpa [#allocation4], 0
    // Predicated region
    $region2: #{tpu_custom_call.1} parent=1 // pred_check
      _
    $region3: #{tpu_custom_call.1} parent=1 // pred_check_branch
      %15 = sbr.rel (0) target = $region5
    $region4: #{tpu_custom_call.1} parent=1 // pred_region
      %s17 = ssub.s32 4096, 4096
      %18 = vsyncadd [#allocation3], %s17
      %s19 = sshll.u32 [#allocation2], 4
      %s20 = int_to_ptr.vmem [resolvable:$true] %s19
      %25 = dma.hbm_to_vmem [thread:$0]  %s0, 4096, %s20, [#allocation3], 128, 128, 8
    $region5: #{tpu_custom_call.1} parent=1 // pred_fallthru
      _
    // Predicated region
    $region6: #{tpu_custom_call.1} parent=1 // pred_check
      _
    $region7: #{tpu_custom_call.1} parent=1 // pred_check_branch
      %27 = sbr.rel (0) target = $region9
    $region8: #{tpu_custom_call.1} parent=1 // pred_region
      %s29 = ssub.s32 4096, 4096
      %30 = vsyncadd [#allocation6], %s29
      %s31 = sshll.u32 [#allocation5], 4
      %s32 = int_to_ptr.vmem [resolvable:$true] %s31
      %37 = dma.hbm_to_vmem [thread:$0]  %s1, 4096, %s32, [#allocation6], 256, 256, 16
    $region9: #{tpu_custom_call.1} parent=1 // pred_fallthru
      _
    // Predicated region
    $region10: #{tpu_custom_call.1} parent=1 // pred_check
      _
    $region11: #{tpu_custom_call.1} parent=1 // pred_check_branch
      %39 = sbr.rel (0) target = $region13
    $region12: #{tpu_custom_call.1} parent=1 // pred_region
      %s41 = ssub.s32 64, 64
      %42 = vsyncadd [#allocation6], %s41
      %s44 = sshll.u32 [#allocation7], 4
      %s45 = int_to_ptr.vmem [resolvable:$true] %s44
      %47 = dma.hbm_to_vmem [thread:$0]  %s2, 64, %s45, [#allocation6]
    $region13: #{tpu_custom_call.1} parent=1 // pred_fallthru
      _
    // Predicated region
    $region14: #{tpu_custom_call.1} parent=1 // pred_check
      _
    $region15: #{tpu_custom_call.1} parent=1 // pred_check_branch
      %49 = sbr.rel (0) target = $region17
    $region16: #{tpu_custom_call.1} parent=1 // pred_region
      %s51 = ssub.s32 4096, 4096
      %52 = vsyncadd [#allocation9], %s51
      %s53 = sshll.u32 [#allocation8], 4
      %s54 = int_to_ptr.vmem [resolvable:$true] %s53
      %59 = dma.hbm_to_vmem [thread:$0]  %s3, 4096, %s54, [#allocation9], 64, 64, 4
    $region17: #{tpu_custom_call.1} parent=1 // pred_fallthru
      _
    // Predicated region
    $region18: #{tpu_custom_call.1} parent=1 // pred_check
      _
    $region19: #{tpu_custom_call.1} parent=1 // pred_check_branch
      %61 = sbr.rel (0) target = $region21
    $region20: #{tpu_custom_call.1} parent=1 // pred_region
      _
    $region21: #{tpu_custom_call.1} parent=1 // pred_fallthru
      _
    // Predicated region
    $region22: #{tpu_custom_call.1} parent=1 // pred_check
      _
    $region23: #{tpu_custom_call.1} parent=1 // pred_check_branch
      %63 = sbr.rel (0) target = $region25
    $region24: #{tpu_custom_call.1} parent=1 // pred_region
      %64 = dma.done [#allocation3], 4096
    $region25: #{tpu_custom_call.1} parent=1 // pred_fallthru
      _
    // Predicated region
    $region26: #{tpu_custom_call.1} parent=1 // pred_check
      _
    $region27: #{tpu_custom_call.1} parent=1 // pred_check_branch
      %66 = sbr.rel (0) target = $region29
    $region28: #{tpu_custom_call.1} parent=1 // pred_region
      %67 = dma.done [#allocation6], 4096
    $region29: #{tpu_custom_call.1} parent=1 // pred_fallthru
      _
    // Predicated region
    $region30: #{tpu_custom_call.1} parent=1 // pred_check
      _
    $region31: #{tpu_custom_call.1} parent=1 // pred_check_branch
      %69 = sbr.rel (0) target = $region33
    $region32: #{tpu_custom_call.1} parent=1 // pred_region
      %70 = dma.done [#allocation6], 64
    $region33: #{tpu_custom_call.1} parent=1 // pred_fallthru
      _
    // Predicated region
    $region34: #{tpu_custom_call.1} parent=1 // pred_check
      _
    $region35: #{tpu_custom_call.1} parent=1 // pred_check_branch
      %72 = sbr.rel (0) target = $region37
    $region36: #{tpu_custom_call.1} parent=1 // pred_region
      %73 = dma.done [#allocation9], 4096
    $region37: #{tpu_custom_call.1} parent=1 // pred_fallthru
      _
    %v75 = vld [vmem:[#allocation2] sm:$0xff]
    %v76 = vld [vmem:[#allocation2 + $0x8] sm:$0xff]
    %v77 = vld [vmem:[#allocation2 + $0x10] sm:$0xff]
    %v78 = vld [vmem:[#allocation2 + $0x18] sm:$0xff]
    %v79 = vld [vmem:[#allocation2 + $0x20] sm:$0xff]
    %v80 = vld [vmem:[#allocation2 + $0x28] sm:$0xff]
    %v81 = vld [vmem:[#allocation2 + $0x30] sm:$0xff]
    %v82 = vld [vmem:[#allocation2 + $0x38] sm:$0xff]
    %v83 = vld [vmem:[#allocation2 + $0x40] sm:$0xff]
    %v84 = vld [vmem:[#allocation2 + $0x48] sm:$0xff]
    %v85 = vld [vmem:[#allocation2 + $0x50] sm:$0xff]
    %v86 = vld [vmem:[#allocation2 + $0x58] sm:$0xff]
    %v87 = vld [vmem:[#allocation2 + $0x60] sm:$0xff]
    %v88 = vld [vmem:[#allocation2 + $0x68] sm:$0xff]
    %v89 = vld [vmem:[#allocation2 + $0x70] sm:$0xff]
    %v90 = vld [vmem:[#allocation2 + $0x78] sm:$0xff]
    %v91 = vld [vmem:[#allocation2 + $0x80] sm:$0xff]
    %v92 = vld [vmem:[#allocation2 + $0x88] sm:$0xff]
    %v93 = vld [vmem:[#allocation2 + $0x90] sm:$0xff]
    %v94 = vld [vmem:[#allocation2 + $0x98] sm:$0xff]
    %v95 = vld [vmem:[#allocation2 + $0xa0] sm:$0xff]
    %v96 = vld [vmem:[#allocation2 + $0xa8] sm:$0xff]
    %v97 = vld [vmem:[#allocation2 + $0xb0] sm:$0xff]
    %v98 = vld [vmem:[#allocation2 + $0xb8] sm:$0xff]
    %v99 = vld [vmem:[#allocation2 + $0xc0] sm:$0xff]
    %v100 = vld [vmem:[#allocation2 + $0xc8] sm:$0xff]
    %v101 = vld [vmem:[#allocation2 + $0xd0] sm:$0xff]
    %v102 = vld [vmem:[#allocation2 + $0xd8] sm:$0xff]
    %v103 = vld [vmem:[#allocation2 + $0xe0] sm:$0xff]
    %v104 = vld [vmem:[#allocation2 + $0xe8] sm:$0xff]
    %v105 = vld [vmem:[#allocation2 + $0xf0] sm:$0xff]
    %v106 = vld [vmem:[#allocation2 + $0xf8] sm:$0xff]
    %v107 = vpack.c.bf16 %v76, %v75
    %v108 = vpack.c.bf16 %v78, %v77
    %v109 = vpack.c.bf16 %v80, %v79
    %v110 = vpack.c.bf16 %v82, %v81
    %v111 = vpack.c.bf16 %v84, %v83
    %v112 = vpack.c.bf16 %v86, %v85
    %v113 = vpack.c.bf16 %v88, %v87
    %v114 = vpack.c.bf16 %v90, %v89
    %v115 = vpack.c.bf16 %v92, %v91
    %v116 = vpack.c.bf16 %v94, %v93
    %v117 = vpack.c.bf16 %v96, %v95
    %v118 = vpack.c.bf16 %v98, %v97
    %v119 = vpack.c.bf16 %v100, %v99
    %v120 = vpack.c.bf16 %v102, %v101
    %v121 = vpack.c.bf16 %v104, %v103
    %v122 = vpack.c.bf16 %v106, %v105
    %v123 = vld [vmem:[#allocation5] sm:$0xff]
    %v124 = vld [vmem:[#allocation5 + $0x8] sm:$0xff]
    %v125 = vld [vmem:[#allocation5 + $0x10] sm:$0xff]
    %v126 = vld [vmem:[#allocation5 + $0x18] sm:$0xff]
    %v127 = vld [vmem:[#allocation5 + $0x20] sm:$0xff]
    %v128 = vld [vmem:[#allocation5 + $0x28] sm:$0xff]
    %v129 = vld [vmem:[#allocation5 + $0x30] sm:$0xff]
    %v130 = vld [vmem:[#allocation5 + $0x38] sm:$0xff]
    %v131 = vld [vmem:[#allocation5 + $0x40] sm:$0xff]
    %v132 = vld [vmem:[#allocation5 + $0x48] sm:$0xff]
    %v133 = vld [vmem:[#allocation5 + $0x50] sm:$0xff]
    %v134 = vld [vmem:[#allocation5 + $0x58] sm:$0xff]
    %v135 = vld [vmem:[#allocation5 + $0x60] sm:$0xff]
    %v136 = vld [vmem:[#allocation5 + $0x68] sm:$0xff]
    %v137 = vld [vmem:[#allocation5 + $0x70] sm:$0xff]
    %v138 = vld [vmem:[#allocation5 + $0x78] sm:$0xff]
    %v139 = vld [vmem:[#allocation5 + $0x80] sm:$0xff]
    %v140 = vld [vmem:[#allocation5 + $0x88] sm:$0xff]
    %v141 = vld [vmem:[#allocation5 + $0x90] sm:$0xff]
    %v142 = vld [vmem:[#allocation5 + $0x98] sm:$0xff]
    %v143 = vld [vmem:[#allocation5 + $0xa0] sm:$0xff]
    %v144 = vld [vmem:[#allocation5 + $0xa8] sm:$0xff]
    %v145 = vld [vmem:[#allocation5 + $0xb0] sm:$0xff]
    %v146 = vld [vmem:[#allocation5 + $0xb8] sm:$0xff]
    %v147 = vld [vmem:[#allocation5 + $0xc0] sm:$0xff]
    %v148 = vld [vmem:[#allocation5 + $0xc8] sm:$0xff]
    %v149 = vld [vmem:[#allocation5 + $0xd0] sm:$0xff]
    %v150 = vld [vmem:[#allocation5 + $0xd8] sm:$0xff]
    %v151 = vld [vmem:[#allocation5 + $0xe0] sm:$0xff]
    %v152 = vld [vmem:[#allocation5 + $0xe8] sm:$0xff]
    %v153 = vld [vmem:[#allocation5 + $0xf0] sm:$0xff]
    %v154 = vld [vmem:[#allocation5 + $0xf8] sm:$0xff]
    %v155 = vld [vmem:[#allocation7] sm:$0xf]
    %v157 = vlaneseq
    %v158 = vshrl.u32 %v157, 7
    %v159 = vsub.s32 0, %v158
    %v160 = vrot.slane %v155, %v159
    %v161 = vlaneseq
    %v162 = vshrl.u32 %v161, 7
    %v163 = vsub.s32 1, %v162
    %v164 = vrot.slane %v155, %v163
    %v165 = vlaneseq
    %v166 = vshrl.u32 %v165, 7
    %v167 = vsub.s32 2, %v166
    %v168 = vrot.slane %v155, %v167
    %v169 = vlaneseq
    %v170 = vshrl.u32 %v169, 7
    %v171 = vsub.s32 3, %v170
    %v172 = vrot.slane %v155, %v171
    %v209 = vunpack.c.l.b16 %v123
    %v210 = vunpack.c.h.b16 %v123
    %v211 = vunpack.c.l.b16 %v124
    %v212 = vunpack.c.h.b16 %v124
    %v213 = vunpack.c.l.b16 %v125
    %v214 = vunpack.c.h.b16 %v125
    %v215 = vunpack.c.l.b16 %v126
    %v216 = vunpack.c.h.b16 %v126
    %v217 = vunpack.c.l.b16 %v127
    %v218 = vunpack.c.h.b16 %v127
    %v219 = vunpack.c.l.b16 %v128
    %v220 = vunpack.c.h.b16 %v128
    %v221 = vunpack.c.l.b16 %v129
    %v222 = vunpack.c.h.b16 %v129
    %v223 = vunpack.c.l.b16 %v130
    %v224 = vunpack.c.h.b16 %v130
    %v225 = vunpack.c.l.b16 %v131
    %v226 = vunpack.c.h.b16 %v131
    %v227 = vunpack.c.l.b16 %v132
    %v228 = vunpack.c.h.b16 %v132
    %v229 = vunpack.c.l.b16 %v133
    %v230 = vunpack.c.h.b16 %v133
    %v231 = vunpack.c.l.b16 %v134
    %v232 = vunpack.c.h.b16 %v134
    %v233 = vunpack.c.l.b16 %v135
    %v234 = vunpack.c.h.b16 %v135
    %v235 = vunpack.c.l.b16 %v136
    %v236 = vunpack.c.h.b16 %v136
    %v237 = vunpack.c.l.b16 %v137
    %v238 = vunpack.c.h.b16 %v137
    %v239 = vunpack.c.l.b16 %v138
    %v240 = vunpack.c.h.b16 %v138
    %v241 = vunpack.c.l.b16 %v139
    %v242 = vunpack.c.h.b16 %v139
    %v243 = vunpack.c.l.b16 %v140
    %v244 = vunpack.c.h.b16 %v140
    %v245 = vunpack.c.l.b16 %v141
    %v246 = vunpack.c.h.b16 %v141
    %v247 = vunpack.c.l.b16 %v142
    %v248 = vunpack.c.h.b16 %v142
    %v249 = vunpack.c.l.b16 %v143
    %v250 = vunpack.c.h.b16 %v143
    %v251 = vunpack.c.l.b16 %v144
    %v252 = vunpack.c.h.b16 %v144
    %v253 = vunpack.c.l.b16 %v145
    %v254 = vunpack.c.h.b16 %v145
    %v255 = vunpack.c.l.b16 %v146
    %v256 = vunpack.c.h.b16 %v146
    %v257 = vunpack.c.l.b16 %v147
    %v258 = vunpack.c.h.b16 %v147
    %v259 = vunpack.c.l.b16 %v148
    %v260 = vunpack.c.h.b16 %v148
    %v261 = vunpack.c.l.b16 %v149
    %v262 = vunpack.c.h.b16 %v149
    %v263 = vunpack.c.l.b16 %v150
    %v264 = vunpack.c.h.b16 %v150
    %v265 = vunpack.c.l.b16 %v151
    %v266 = vunpack.c.h.b16 %v151
    %v267 = vunpack.c.l.b16 %v152
    %v268 = vunpack.c.h.b16 %v152
    %v269 = vunpack.c.l.b16 %v153
    %v270 = vunpack.c.h.b16 %v153
    %v271 = vunpack.c.l.b16 %v154
    %v272 = vunpack.c.h.b16 %v154
    %v273 = vpack.c.b16 %v213, %v209
    %v274 = vpack.c.b16 %v214, %v210
    %v275 = vpack.c.b16 %v215, %v211
    %v276 = vpack.c.b16 %v216, %v212
    %v277 = vpack.c.b16 %v221, %v217
    %v278 = vpack.c.b16 %v222, %v218
    %v279 = vpack.c.b16 %v223, %v219
    %v280 = vpack.c.b16 %v224, %v220
    %v281 = vpack.c.b16 %v229, %v225
    %v282 = vpack.c.b16 %v230, %v226
    %v283 = vpack.c.b16 %v231, %v227
    %v284 = vpack.c.b16 %v232, %v228
    %v285 = vpack.c.b16 %v237, %v233
    %v286 = vpack.c.b16 %v238, %v234
    %v287 = vpack.c.b16 %v239, %v235
    %v288 = vpack.c.b16 %v240, %v236
    %v289 = vpack.c.b16 %v245, %v241
    %v290 = vpack.c.b16 %v246, %v242
    %v291 = vpack.c.b16 %v247, %v243
    %v292 = vpack.c.b16 %v248, %v244
    %v293 = vpack.c.b16 %v253, %v249
    %v294 = vpack.c.b16 %v254, %v250
    %v295 = vpack.c.b16 %v255, %v251
    %v296 = vpack.c.b16 %v256, %v252
    %v297 = vpack.c.b16 %v261, %v257
    %v298 = vpack.c.b16 %v262, %v258
    %v299 = vpack.c.b16 %v263, %v259
    %v300 = vpack.c.b16 %v264, %v260
    %v301 = vpack.c.b16 %v269, %v265
    %v302 = vpack.c.b16 %v270, %v266
    %v303 = vpack.c.b16 %v271, %v267
    %v304 = vpack.c.b16 %v272, %v268
    %337 = vmatprep.subr.bf16.mxu0 %v302
    %338 = vmatpush1.bf16.msra.mxu0 %v301
    %339 = vmatprep.subr.bf16.mxu0 %v298
    %340 = vmatpush1.bf16.msra.mxu0 %v297
    %341 = vmatprep.subr.bf16.mxu0 %v294
    %342 = vmatpush1.bf16.msra.mxu0 %v293
    %343 = vmatprep.subr.bf16.mxu0 %v290
    %344 = vmatpush1.bf16.msra.mxu0 %v289
    %345 = vmatprep.subr.bf16.mxu0 %v286
    %346 = vmatpush1.bf16.msra.mxu0 %v285
    %347 = vmatprep.subr.bf16.mxu0 %v282
    %348 = vmatpush1.bf16.msra.mxu0 %v281
    %349 = vmatprep.subr.bf16.mxu0 %v278
    %350 = vmatpush1.bf16.msra.mxu0 %v277
    %351 = vmatprep.subr.bf16.mxu0 %v274
    %352 = vmatpush1.bf16.msra.mxu0 %v273
    %353 = vmatprep.subr.bf16.mxu0 0
    %354 = vmatpush2.bf16.msra.mxu0 0
    %355 = vmatprep.subr.bf16.mxu0 0
    %356 = vmatpush2.bf16.msra.mxu0 0
    %357 = vmatprep.subr.bf16.mxu0 0
    %358 = vmatpush2.bf16.msra.mxu0 0
    %359 = vmatprep.subr.bf16.mxu0 0
    %360 = vmatpush2.bf16.msra.mxu0 0
    %361 = vmatprep.subr.bf16.mxu0 0
    %362 = vmatpush2.bf16.msra.mxu0 0
    %363 = vmatprep.subr.bf16.mxu0 0
    %364 = vmatpush2.bf16.msra.mxu0 0
    %365 = vmatprep.subr.bf16.mxu0 0
    %366 = vmatpush2.bf16.msra.mxu0 0
    %367 = vmatprep.subr.bf16.mxu0 0
    %368 = vmatpush2.bf16.msra.mxu0 0
    %369 = vmatprep.mubr.bf16.mxu0 0
    %370 = vmatmul.mubr.bf16.gmra.mxu0 %v107
    %v371 = vpop.f32.mrf.mxu0
    %v372 = vadd.f32 %v160, %v371
    %v373 = vpop.f32.mrf.mxu0
    %v374 = vadd.f32 %v164, %v373
    %v375 = vpop.f32.mrf.mxu0
    %v376 = vadd.f32 %v160, %v375
    %v377 = vpop.f32.mrf.mxu0
    %v378 = vadd.f32 %v164, %v377
    %379 = vmatprep.mubr.bf16.mxu0 0
    %380 = vmatmul.mubr.bf16.gmra.mxu0 %v108
    %v381 = vpop.f32.mrf.mxu0
    %v382 = vadd.f32 %v160, %v381
    %v383 = vpop.f32.mrf.mxu0
    %v384 = vadd.f32 %v164, %v383
    %v385 = vpop.f32.mrf.mxu0
    %v386 = vadd.f32 %v160, %v385
    %v387 = vpop.f32.mrf.mxu0
    %v388 = vadd.f32 %v164, %v387
    %389 = vmatprep.mubr.bf16.mxu0 0
    %390 = vmatmul.mubr.bf16.gmra.mxu0 %v109
    %v391 = vpop.f32.mrf.mxu0
    %v392 = vadd.f32 %v160, %v391
    %v393 = vpop.f32.mrf.mxu0
    %v394 = vadd.f32 %v164, %v393
    %v395 = vpop.f32.mrf.mxu0
    %v396 = vadd.f32 %v160, %v395
    %v397 = vpop.f32.mrf.mxu0
    %v398 = vadd.f32 %v164, %v397
    %399 = vmatprep.mubr.bf16.mxu0 0
    %400 = vmatmul.mubr.bf16.gmra.mxu0 %v110
    %v401 = vpop.f32.mrf.mxu0
    %v402 = vadd.f32 %v160, %v401
    %v403 = vpop.f32.mrf.mxu0
    %v404 = vadd.f32 %v164, %v403
    %v405 = vpop.f32.mrf.mxu0
    %v406 = vadd.f32 %v160, %v405
    %v407 = vpop.f32.mrf.mxu0
    %v408 = vadd.f32 %v164, %v407
    %409 = vmatprep.mubr.bf16.mxu0 0
    %410 = vmatmul.mubr.bf16.gmra.mxu0 %v111
    %v411 = vpop.f32.mrf.mxu0
    %v412 = vadd.f32 %v160, %v411
    %v413 = vpop.f32.mrf.mxu0
    %v414 = vadd.f32 %v164, %v413
    %v415 = vpop.f32.mrf.mxu0
    %v416 = vadd.f32 %v160, %v415
    %v417 = vpop.f32.mrf.mxu0
    %v418 = vadd.f32 %v164, %v417
    %419 = vmatprep.mubr.bf16.mxu0 0
    %420 = vmatmul.mubr.bf16.gmra.mxu0 %v112
    %v421 = vpop.f32.mrf.mxu0
    %v422 = vadd.f32 %v160, %v421
    %v423 = vpop.f32.mrf.mxu0
    %v424 = vadd.f32 %v164, %v423
    %v425 = vpop.f32.mrf.mxu0
    %v426 = vadd.f32 %v160, %v425
    %v427 = vpop.f32.mrf.mxu0
    %v428 = vadd.f32 %v164, %v427
    %429 = vmatprep.mubr.bf16.mxu0 0
    %430 = vmatmul.mubr.bf16.gmra.mxu0 %v113
    %v431 = vpop.f32.mrf.mxu0
    %v432 = vadd.f32 %v160, %v431
    %v433 = vpop.f32.mrf.mxu0
    %v434 = vadd.f32 %v164, %v433
    %v435 = vpop.f32.mrf.mxu0
    %v436 = vadd.f32 %v160, %v435
    %v437 = vpop.f32.mrf.mxu0
    %v438 = vadd.f32 %v164, %v437
    %439 = vmatprep.mubr.bf16.mxu0 0
    %440 = vmatmul.mubr.bf16.gmra.mxu0 %v114
    %v441 = vpop.f32.mrf.mxu0
    %v442 = vadd.f32 %v160, %v441
    %v443 = vpop.f32.mrf.mxu0
    %v444 = vadd.f32 %v164, %v443
    %v445 = vpop.f32.mrf.mxu0
    %v446 = vadd.f32 %v160, %v445
    %v447 = vpop.f32.mrf.mxu0
    %v448 = vadd.f32 %v164, %v447
    %449 = vmatprep.mubr.bf16.mxu0 0
    %450 = vmatmul.mubr.bf16.gmra.mxu0 %v115
    %v451 = vpop.f32.mrf.mxu0
    %v452 = vadd.f32 %v160, %v451
    %v453 = vpop.f32.mrf.mxu0
    %v454 = vadd.f32 %v164, %v453
    %v455 = vpop.f32.mrf.mxu0
    %v456 = vadd.f32 %v160, %v455
    %v457 = vpop.f32.mrf.mxu0
    %v458 = vadd.f32 %v164, %v457
    %459 = vmatprep.mubr.bf16.mxu0 0
    %460 = vmatmul.mubr.bf16.gmra.mxu0 %v116
    %v461 = vpop.f32.mrf.mxu0
    %v462 = vadd.f32 %v160, %v461
    %v463 = vpop.f32.mrf.mxu0
    %v464 = vadd.f32 %v164, %v463
    %v465 = vpop.f32.mrf.mxu0
    %v466 = vadd.f32 %v160, %v465
    %v467 = vpop.f32.mrf.mxu0
    %v468 = vadd.f32 %v164, %v467
    %469 = vmatprep.mubr.bf16.mxu0 0
    %470 = vmatmul.mubr.bf16.gmra.mxu0 %v117
    %v471 = vpop.f32.mrf.mxu0
    %v472 = vadd.f32 %v160, %v471
    %v473 = vpop.f32.mrf.mxu0
    %v474 = vadd.f32 %v164, %v473
    %v475 = vpop.f32.mrf.mxu0
    %v476 = vadd.f32 %v160, %v475
    %v477 = vpop.f32.mrf.mxu0
    %v478 = vadd.f32 %v164, %v477
    %479 = vmatprep.mubr.bf16.mxu0 0
    %480 = vmatmul.mubr.bf16.gmra.mxu0 %v118
    %v481 = vpop.f32.mrf.mxu0
    %v482 = vadd.f32 %v160, %v481
    %v483 = vpop.f32.mrf.mxu0
    %v484 = vadd.f32 %v164, %v483
    %v485 = vpop.f32.mrf.mxu0
    %v486 = vadd.f32 %v160, %v485
    %v487 = vpop.f32.mrf.mxu0
    %v488 = vadd.f32 %v164, %v487
    %489 = vmatprep.mubr.bf16.mxu0 0
    %490 = vmatmul.mubr.bf16.gmra.mxu0 %v119
    %v491 = vpop.f32.mrf.mxu0
    %v492 = vadd.f32 %v160, %v491
    %v493 = vpop.f32.mrf.mxu0
    %v494 = vadd.f32 %v164, %v493
    %v495 = vpop.f32.mrf.mxu0
    %v496 = vadd.f32 %v160, %v495
    %v497 = vpop.f32.mrf.mxu0
    %v498 = vadd.f32 %v164, %v497
    %499 = vmatprep.mubr.bf16.mxu0 0
    %500 = vmatmul.mubr.bf16.gmra.mxu0 %v120
    %v501 = vpop.f32.mrf.mxu0
    %v502 = vadd.f32 %v160, %v501
    %v503 = vpop.f32.mrf.mxu0
    %v504 = vadd.f32 %v164, %v503
    %v505 = vpop.f32.mrf.mxu0
    %v506 = vadd.f32 %v160, %v505
    %v507 = vpop.f32.mrf.mxu0
    %v508 = vadd.f32 %v164, %v507
    %509 = vmatprep.mubr.bf16.mxu0 0
    %510 = vmatmul.mubr.bf16.gmra.mxu0 %v121
    %v511 = vpop.f32.mrf.mxu0
    %v512 = vadd.f32 %v160, %v511
    %v513 = vpop.f32.mrf.mxu0
    %v514 = vadd.f32 %v164, %v513
    %v515 = vpop.f32.mrf.mxu0
    %v516 = vadd.f32 %v160, %v515
    %v517 = vpop.f32.mrf.mxu0
    %v518 = vadd.f32 %v164, %v517
    %519 = vmatprep.mubr.bf16.mxu0 0
    %520 = vmatmul.mubr.bf16.gmra.mxu0 %v122
    %v521 = vpop.f32.mrf.mxu0
    %v522 = vadd.f32 %v160, %v521
    %v523 = vpop.f32.mrf.mxu0
    %v524 = vadd.f32 %v164, %v523
    %v525 = vpop.f32.mrf.mxu0
    %v526 = vadd.f32 %v160, %v525
    %v527 = vpop.f32.mrf.mxu0
    %v528 = vadd.f32 %v164, %v527
    %529 = vdwg.mxu0
    %530 = vmatprep.subr.bf16.mxu0 %v304
    %531 = vmatpush1.bf16.msra.mxu0 %v303
    %532 = vmatprep.subr.bf16.mxu0 %v300
    %533 = vmatpush1.bf16.msra.mxu0 %v299
    %534 = vmatprep.subr.bf16.mxu0 %v296
    %535 = vmatpush1.bf16.msra.mxu0 %v295
    %536 = vmatprep.subr.bf16.mxu0 %v292
    %537 = vmatpush1.bf16.msra.mxu0 %v291
    %538 = vmatprep.subr.bf16.mxu0 %v288
    %539 = vmatpush1.bf16.msra.mxu0 %v287
    %540 = vmatprep.subr.bf16.mxu0 %v284
    %541 = vmatpush1.bf16.msra.mxu0 %v283
    %542 = vmatprep.subr.bf16.mxu0 %v280
    %543 = vmatpush1.bf16.msra.mxu0 %v279
    %544 = vmatprep.subr.bf16.mxu0 %v276
    %545 = vmatpush1.bf16.msra.mxu0 %v275
    %546 = vmatprep.subr.bf16.mxu0 0
    %547 = vmatpush2.bf16.msra.mxu0 0
    %548 = vmatprep.subr.bf16.mxu0 0
    %549 = vmatpush2.bf16.msra.mxu0 0
    %550 = vmatprep.subr.bf16.mxu0 0
    %551 = vmatpush2.bf16.msra.mxu0 0
    %552 = vmatprep.subr.bf16.mxu0 0
    %553 = vmatpush2.bf16.msra.mxu0 0
    %554 = vmatprep.subr.bf16.mxu0 0
    %555 = vmatpush2.bf16.msra.mxu0 0
    %556 = vmatprep.subr.bf16.mxu0 0
    %557 = vmatpush2.bf16.msra.mxu0 0
    %558 = vmatprep.subr.bf16.mxu0 0
    %559 = vmatpush2.bf16.msra.mxu0 0
    %560 = vmatprep.subr.bf16.mxu0 0
    %561 = vmatpush2.bf16.msra.mxu0 0
    %562 = vmatprep.mubr.bf16.mxu0 0
    %563 = vmatmul.mubr.bf16.gmra.mxu0 %v107
    %v564 = vpop.f32.mrf.mxu0
    %v565 = vadd.f32 %v168, %v564
    %v566 = vpop.f32.mrf.mxu0
    %v567 = vadd.f32 %v172, %v566
    %v568 = vpop.f32.mrf.mxu0
    %v569 = vadd.f32 %v168, %v568
    %v570 = vpop.f32.mrf.mxu0
    %v571 = vadd.f32 %v172, %v570
    %572 = vmatprep.mubr.bf16.mxu0 0
    %573 = vmatmul.mubr.bf16.gmra.mxu0 %v108
    %v574 = vpop.f32.mrf.mxu0
    %v575 = vadd.f32 %v168, %v574
    %v576 = vpop.f32.mrf.mxu0
    %v577 = vadd.f32 %v172, %v576
    %v578 = vpop.f32.mrf.mxu0
    %v579 = vadd.f32 %v168, %v578
    %v580 = vpop.f32.mrf.mxu0
    %v581 = vadd.f32 %v172, %v580
    %582 = vmatprep.mubr.bf16.mxu0 0
    %583 = vmatmul.mubr.bf16.gmra.mxu0 %v109
    %v584 = vpop.f32.mrf.mxu0
    %v585 = vadd.f32 %v168, %v584
    %v586 = vpop.f32.mrf.mxu0
    %v587 = vadd.f32 %v172, %v586
    %v588 = vpop.f32.mrf.mxu0
    %v589 = vadd.f32 %v168, %v588
    %v590 = vpop.f32.mrf.mxu0
    %v591 = vadd.f32 %v172, %v590
    %592 = vmatprep.mubr.bf16.mxu0 0
    %593 = vmatmul.mubr.bf16.gmra.mxu0 %v110
    %v594 = vpop.f32.mrf.mxu0
    %v595 = vadd.f32 %v168, %v594
    %v596 = vpop.f32.mrf.mxu0
    %v597 = vadd.f32 %v172, %v596
    %v598 = vpop.f32.mrf.mxu0
    %v599 = vadd.f32 %v168, %v598
    %v600 = vpop.f32.mrf.mxu0
    %v601 = vadd.f32 %v172, %v600
    %602 = vmatprep.mubr.bf16.mxu0 0
    %603 = vmatmul.mubr.bf16.gmra.mxu0 %v111
    %v604 = vpop.f32.mrf.mxu0
    %v605 = vadd.f32 %v168, %v604
    %v606 = vpop.f32.mrf.mxu0
    %v607 = vadd.f32 %v172, %v606
    %v608 = vpop.f32.mrf.mxu0
    %v609 = vadd.f32 %v168, %v608
    %v610 = vpop.f32.mrf.mxu0
    %v611 = vadd.f32 %v172, %v610
    %612 = vmatprep.mubr.bf16.mxu0 0
    %613 = vmatmul.mubr.bf16.gmra.mxu0 %v112
    %v614 = vpop.f32.mrf.mxu0
    %v615 = vadd.f32 %v168, %v614
    %v616 = vpop.f32.mrf.mxu0
    %v617 = vadd.f32 %v172, %v616
    %v618 = vpop.f32.mrf.mxu0
    %v619 = vadd.f32 %v168, %v618
    %v620 = vpop.f32.mrf.mxu0
    %v621 = vadd.f32 %v172, %v620
    %622 = vmatprep.mubr.bf16.mxu0 0
    %623 = vmatmul.mubr.bf16.gmra.mxu0 %v113
    %v624 = vpop.f32.mrf.mxu0
    %v625 = vadd.f32 %v168, %v624
    %v626 = vpop.f32.mrf.mxu0
    %v627 = vadd.f32 %v172, %v626
    %v628 = vpop.f32.mrf.mxu0
    %v629 = vadd.f32 %v168, %v628
    %v630 = vpop.f32.mrf.mxu0
    %v631 = vadd.f32 %v172, %v630
    %632 = vmatprep.mubr.bf16.mxu0 0
    %633 = vmatmul.mubr.bf16.gmra.mxu0 %v114
    %v634 = vpop.f32.mrf.mxu0
    %v635 = vadd.f32 %v168, %v634
    %v636 = vpop.f32.mrf.mxu0
    %v637 = vadd.f32 %v172, %v636
    %v638 = vpop.f32.mrf.mxu0
    %v639 = vadd.f32 %v168, %v638
    %v640 = vpop.f32.mrf.mxu0
    %v641 = vadd.f32 %v172, %v640
    %642 = vmatprep.mubr.bf16.mxu0 0
    %643 = vmatmul.mubr.bf16.gmra.mxu0 %v115
    %v644 = vpop.f32.mrf.mxu0
    %v645 = vadd.f32 %v168, %v644
    %v646 = vpop.f32.mrf.mxu0
    %v647 = vadd.f32 %v172, %v646
    %v648 = vpop.f32.mrf.mxu0
    %v649 = vadd.f32 %v168, %v648
    %v650 = vpop.f32.mrf.mxu0
    %v651 = vadd.f32 %v172, %v650
    %652 = vmatprep.mubr.bf16.mxu0 0
    %653 = vmatmul.mubr.bf16.gmra.mxu0 %v116
    %v654 = vpop.f32.mrf.mxu0
    %v655 = vadd.f32 %v168, %v654
    %v656 = vpop.f32.mrf.mxu0
    %v657 = vadd.f32 %v172, %v656
    %v658 = vpop.f32.mrf.mxu0
    %v659 = vadd.f32 %v168, %v658
    %v660 = vpop.f32.mrf.mxu0
    %v661 = vadd.f32 %v172, %v660
    %662 = vmatprep.mubr.bf16.mxu0 0
    %663 = vmatmul.mubr.bf16.gmra.mxu0 %v117
    %v664 = vpop.f32.mrf.mxu0
    %v665 = vadd.f32 %v168, %v664
    %v666 = vpop.f32.mrf.mxu0
    %v667 = vadd.f32 %v172, %v666
    %v668 = vpop.f32.mrf.mxu0
    %v669 = vadd.f32 %v168, %v668
    %v670 = vpop.f32.mrf.mxu0
    %v671 = vadd.f32 %v172, %v670
    %672 = vmatprep.mubr.bf16.mxu0 0
    %673 = vmatmul.mubr.bf16.gmra.mxu0 %v118
    %v674 = vpop.f32.mrf.mxu0
    %v675 = vadd.f32 %v168, %v674
    %v676 = vpop.f32.mrf.mxu0
    %v677 = vadd.f32 %v172, %v676
    %v678 = vpop.f32.mrf.mxu0
    %v679 = vadd.f32 %v168, %v678
    %v680 = vpop.f32.mrf.mxu0
    %v681 = vadd.f32 %v172, %v680
    %682 = vmatprep.mubr.bf16.mxu0 0
    %683 = vmatmul.mubr.bf16.gmra.mxu0 %v119
    %v684 = vpop.f32.mrf.mxu0
    %v685 = vadd.f32 %v168, %v684
    %v686 = vpop.f32.mrf.mxu0
    %v687 = vadd.f32 %v172, %v686
    %v688 = vpop.f32.mrf.mxu0
    %v689 = vadd.f32 %v168, %v688
    %v690 = vpop.f32.mrf.mxu0
    %v691 = vadd.f32 %v172, %v690
    %692 = vmatprep.mubr.bf16.mxu0 0
    %693 = vmatmul.mubr.bf16.gmra.mxu0 %v120
    %v694 = vpop.f32.mrf.mxu0
    %v695 = vadd.f32 %v168, %v694
    %v696 = vpop.f32.mrf.mxu0
    %v697 = vadd.f32 %v172, %v696
    %v698 = vpop.f32.mrf.mxu0
    %v699 = vadd.f32 %v168, %v698
    %v700 = vpop.f32.mrf.mxu0
    %v701 = vadd.f32 %v172, %v700
    %702 = vmatprep.mubr.bf16.mxu0 0
    %703 = vmatmul.mubr.bf16.gmra.mxu0 %v121
    %v704 = vpop.f32.mrf.mxu0
    %v705 = vadd.f32 %v168, %v704
    %v706 = vpop.f32.mrf.mxu0
    %v707 = vadd.f32 %v172, %v706
    %v708 = vpop.f32.mrf.mxu0
    %v709 = vadd.f32 %v168, %v708
    %v710 = vpop.f32.mrf.mxu0
    %v711 = vadd.f32 %v172, %v710
    %712 = vmatprep.mubr.bf16.mxu0 0
    %713 = vmatmul.mubr.bf16.gmra.mxu0 %v122
    %v714 = vpop.f32.mrf.mxu0
    %v715 = vadd.f32 %v168, %v714
    %v716 = vpop.f32.mrf.mxu0
    %v717 = vadd.f32 %v172, %v716
    %v718 = vpop.f32.mrf.mxu0
    %v719 = vadd.f32 %v168, %v718
    %v720 = vpop.f32.mrf.mxu0
    %v721 = vadd.f32 %v172, %v720
    %722 = vdwg.mxu0
    %v723 = vmul.f32 %v372, 0.5
    %v724 = vmul.f32 %v374, 0.5
    %v725 = vmul.f32 %v565, 0.5
    %v726 = vmul.f32 %v567, 0.5
    %v727 = vmul.f32 %v376, 0.5
    %v728 = vmul.f32 %v378, 0.5
    %v729 = vmul.f32 %v569, 0.5
    %v730 = vmul.f32 %v571, 0.5
    %v731 = vmul.f32 %v382, 0.5
    %v732 = vmul.f32 %v384, 0.5
    %v733 = vmul.f32 %v575, 0.5
    %v734 = vmul.f32 %v577, 0.5
    %v735 = vmul.f32 %v386, 0.5
    %v736 = vmul.f32 %v388, 0.5
    %v737 = vmul.f32 %v579, 0.5
    %v738 = vmul.f32 %v581, 0.5
    %v739 = vmul.f32 %v392, 0.5
    %v740 = vmul.f32 %v394, 0.5
    %v741 = vmul.f32 %v585, 0.5
    %v742 = vmul.f32 %v587, 0.5
    %v743 = vmul.f32 %v396, 0.5
    %v744 = vmul.f32 %v398, 0.5
    %v745 = vmul.f32 %v589, 0.5
    %v746 = vmul.f32 %v591, 0.5
    %v747 = vmul.f32 %v402, 0.5
    %v748 = vmul.f32 %v404, 0.5
    %v749 = vmul.f32 %v595, 0.5
    %v750 = vmul.f32 %v597, 0.5
    %v751 = vmul.f32 %v406, 0.5
    %v752 = vmul.f32 %v408, 0.5
    %v753 = vmul.f32 %v599, 0.5
    %v754 = vmul.f32 %v601, 0.5
    %v755 = vmul.f32 %v412, 0.5
    %v756 = vmul.f32 %v414, 0.5
    %v757 = vmul.f32 %v605, 0.5
    %v758 = vmul.f32 %v607, 0.5
    %v759 = vmul.f32 %v416, 0.5
    %v760 = vmul.f32 %v418, 0.5
    %v761 = vmul.f32 %v609, 0.5
    %v762 = vmul.f32 %v611, 0.5
    %v763 = vmul.f32 %v422, 0.5
    %v764 = vmul.f32 %v424, 0.5
    %v765 = vmul.f32 %v615, 0.5
    %v766 = vmul.f32 %v617, 0.5
    %v767 = vmul.f32 %v426, 0.5
    %v768 = vmul.f32 %v428, 0.5
    %v769 = vmul.f32 %v619, 0.5
    %v770 = vmul.f32 %v621, 0.5
    %v771 = vmul.f32 %v432, 0.5
    %v772 = vmul.f32 %v434, 0.5
    %v773 = vmul.f32 %v625, 0.5
    %v774 = vmul.f32 %v627, 0.5
    %v775 = vmul.f32 %v436, 0.5
    %v776 = vmul.f32 %v438, 0.5
    %v777 = vmul.f32 %v629, 0.5
    %v778 = vmul.f32 %v631, 0.5
    %v779 = vmul.f32 %v442, 0.5
    %v780 = vmul.f32 %v444, 0.5
    %v781 = vmul.f32 %v635, 0.5
    %v782 = vmul.f32 %v637, 0.5
    %v783 = vmul.f32 %v446, 0.5
    %v784 = vmul.f32 %v448, 0.5
    %v785 = vmul.f32 %v639, 0.5
    %v786 = vmul.f32 %v641, 0.5
    %v787 = vmul.f32 %v452, 0.5
    %v788 = vmul.f32 %v454, 0.5
    %v789 = vmul.f32 %v645, 0.5
    %v790 = vmul.f32 %v647, 0.5
    %v791 = vmul.f32 %v456, 0.5
    %v792 = vmul.f32 %v458, 0.5
    %v793 = vmul.f32 %v649, 0.5
    %v794 = vmul.f32 %v651, 0.5
    %v795 = vmul.f32 %v462, 0.5
    %v796 = vmul.f32 %v464, 0.5
    %v797 = vmul.f32 %v655, 0.5
    %v798 = vmul.f32 %v657, 0.5
    %v799 = vmul.f32 %v466, 0.5
    %v800 = vmul.f32 %v468, 0.5
    %v801 = vmul.f32 %v659, 0.5
    %v802 = vmul.f32 %v661, 0.5
    %v803 = vmul.f32 %v472, 0.5
    %v804 = vmul.f32 %v474, 0.5
    %v805 = vmul.f32 %v665, 0.5
    %v806 = vmul.f32 %v667, 0.5
    %v807 = vmul.f32 %v476, 0.5
    %v808 = vmul.f32 %v478, 0.5
    %v809 = vmul.f32 %v669, 0.5
    %v810 = vmul.f32 %v671, 0.5
    %v811 = vmul.f32 %v482, 0.5
    %v812 = vmul.f32 %v484, 0.5
    %v813 = vmul.f32 %v675, 0.5
    %v814 = vmul.f32 %v677, 0.5
    %v815 = vmul.f32 %v486, 0.5
    %v816 = vmul.f32 %v488, 0.5
    %v817 = vmul.f32 %v679, 0.5
    %v818 = vmul.f32 %v681, 0.5
    %v819 = vmul.f32 %v492, 0.5
    %v820 = vmul.f32 %v494, 0.5
    %v821 = vmul.f32 %v685, 0.5
    %v822 = vmul.f32 %v687, 0.5
    %v823 = vmul.f32 %v496, 0.5
    %v824 = vmul.f32 %v498, 0.5
    %v825 = vmul.f32 %v689, 0.5
    %v826 = vmul.f32 %v691, 0.5
    %v827 = vmul.f32 %v502, 0.5
    %v828 = vmul.f32 %v504, 0.5
    %v829 = vmul.f32 %v695, 0.5
    %v830 = vmul.f32 %v697, 0.5
    %v831 = vmul.f32 %v506, 0.5
    %v832 = vmul.f32 %v508, 0.5
    %v833 = vmul.f32 %v699, 0.5
    %v834 = vmul.f32 %v701, 0.5
    %v835 = vmul.f32 %v512, 0.5
    %v836 = vmul.f32 %v514, 0.5
    %v837 = vmul.f32 %v705, 0.5
    %v838 = vmul.f32 %v707, 0.5
    %v839 = vmul.f32 %v516, 0.5
    %v840 = vmul.f32 %v518, 0.5
    %v841 = vmul.f32 %v709, 0.5
    %v842 = vmul.f32 %v711, 0.5
    %v843 = vmul.f32 %v522, 0.5
    %v844 = vmul.f32 %v524, 0.5
    %v845 = vmul.f32 %v715, 0.5
    %v846 = vmul.f32 %v717, 0.5
    %v847 = vmul.f32 %v526, 0.5
    %v848 = vmul.f32 %v528, 0.5
    %v849 = vmul.f32 %v719, 0.5
    %v850 = vmul.f32 %v721, 0.5
    %v851 = vmul.f32 %v372, 0.044715
    %v852 = vmul.f32 %v374, 0.044715
    %v853 = vmul.f32 %v565, 0.044715
    %v854 = vmul.f32 %v567, 0.044715
    %v855 = vmul.f32 %v376, 0.044715
    %v856 = vmul.f32 %v378, 0.044715
    %v857 = vmul.f32 %v569, 0.044715
    %v858 = vmul.f32 %v571, 0.044715
    %v859 = vmul.f32 %v382, 0.044715
    %v860 = vmul.f32 %v384, 0.044715
    %v861 = vmul.f32 %v575, 0.044715
    %v862 = vmul.f32 %v577, 0.044715
    %v863 = vmul.f32 %v386, 0.044715
    %v864 = vmul.f32 %v388, 0.044715
    %v865 = vmul.f32 %v579, 0.044715
    %v866 = vmul.f32 %v581, 0.044715
    %v867 = vmul.f32 %v392, 0.044715
    %v868 = vmul.f32 %v394, 0.044715
    %v869 = vmul.f32 %v585, 0.044715
    %v870 = vmul.f32 %v587, 0.044715
    %v871 = vmul.f32 %v396, 0.044715
    %v872 = vmul.f32 %v398, 0.044715
    %v873 = vmul.f32 %v589, 0.044715
    %v874 = vmul.f32 %v591, 0.044715
    %v875 = vmul.f32 %v402, 0.044715
    %v876 = vmul.f32 %v404, 0.044715
    %v877 = vmul.f32 %v595, 0.044715
    %v878 = vmul.f32 %v597, 0.044715
    %v879 = vmul.f32 %v406, 0.044715
    %v880 = vmul.f32 %v408, 0.044715
    %v881 = vmul.f32 %v599, 0.044715
    %v882 = vmul.f32 %v601, 0.044715
    %v883 = vmul.f32 %v412, 0.044715
    %v884 = vmul.f32 %v414, 0.044715
    %v885 = vmul.f32 %v605, 0.044715
    %v886 = vmul.f32 %v607, 0.044715
    %v887 = vmul.f32 %v416, 0.044715
    %v888 = vmul.f32 %v418, 0.044715
    %v889 = vmul.f32 %v609, 0.044715
    %v890 = vmul.f32 %v611, 0.044715
    %v891 = vmul.f32 %v422, 0.044715
    %v892 = vmul.f32 %v424, 0.044715
    %v893 = vmul.f32 %v615, 0.044715
    %v894 = vmul.f32 %v617, 0.044715
    %v895 = vmul.f32 %v426, 0.044715
    %v896 = vmul.f32 %v428, 0.044715
    %v897 = vmul.f32 %v619, 0.044715
    %v898 = vmul.f32 %v621, 0.044715
    %v899 = vmul.f32 %v432, 0.044715
    %v900 = vmul.f32 %v434, 0.044715
    %v901 = vmul.f32 %v625, 0.044715
    %v902 = vmul.f32 %v627, 0.044715
    %v903 = vmul.f32 %v436, 0.044715
    %v904 = vmul.f32 %v438, 0.044715
    %v905 = vmul.f32 %v629, 0.044715
    %v906 = vmul.f32 %v631, 0.044715
    %v907 = vmul.f32 %v442, 0.044715
    %v908 = vmul.f32 %v444, 0.044715
    %v909 = vmul.f32 %v635, 0.044715
    %v910 = vmul.f32 %v637, 0.044715
    %v911 = vmul.f32 %v446, 0.044715
    %v912 = vmul.f32 %v448, 0.044715
    %v913 = vmul.f32 %v639, 0.044715
    %v914 = vmul.f32 %v641, 0.044715
    %v915 = vmul.f32 %v452, 0.044715
    %v916 = vmul.f32 %v454, 0.044715
    %v917 = vmul.f32 %v645, 0.044715
    %v918 = vmul.f32 %v647, 0.044715
    %v919 = vmul.f32 %v456, 0.044715
    %v920 = vmul.f32 %v458, 0.044715
    %v921 = vmul.f32 %v649, 0.044715
    %v922 = vmul.f32 %v651, 0.044715
    %v923 = vmul.f32 %v462, 0.044715
    %v924 = vmul.f32 %v464, 0.044715
    %v925 = vmul.f32 %v655, 0.044715
    %v926 = vmul.f32 %v657, 0.044715
    %v927 = vmul.f32 %v466, 0.044715
    %v928 = vmul.f32 %v468, 0.044715
    %v929 = vmul.f32 %v659, 0.044715
    %v930 = vmul.f32 %v661, 0.044715
    %v931 = vmul.f32 %v472, 0.044715
    %v932 = vmul.f32 %v474, 0.044715
    %v933 = vmul.f32 %v665, 0.044715
    %v934 = vmul.f32 %v667, 0.044715
    %v935 = vmul.f32 %v476, 0.044715
    %v936 = vmul.f32 %v478, 0.044715
    %v937 = vmul.f32 %v669, 0.044715
    %v938 = vmul.f32 %v671, 0.044715
    %v939 = vmul.f32 %v482, 0.044715
    %v940 = vmul.f32 %v484, 0.044715
    %v941 = vmul.f32 %v675, 0.044715
    %v942 = vmul.f32 %v677, 0.044715
    %v943 = vmul.f32 %v486, 0.044715
    %v944 = vmul.f32 %v488, 0.044715
    %v945 = vmul.f32 %v679, 0.044715
    %v946 = vmul.f32 %v681, 0.044715
    %v947 = vmul.f32 %v492, 0.044715
    %v948 = vmul.f32 %v494, 0.044715
    %v949 = vmul.f32 %v685, 0.044715
    %v950 = vmul.f32 %v687, 0.044715
    %v951 = vmul.f32 %v496, 0.044715
    %v952 = vmul.f32 %v498, 0.044715
    %v953 = vmul.f32 %v689, 0.044715
    %v954 = vmul.f32 %v691, 0.044715
    %v955 = vmul.f32 %v502, 0.044715
    %v956 = vmul.f32 %v504, 0.044715
    %v957 = vmul.f32 %v695, 0.044715
    %v958 = vmul.f32 %v697, 0.044715
    %v959 = vmul.f32 %v506, 0.044715
    %v960 = vmul.f32 %v508, 0.044715
    %v961 = vmul.f32 %v699, 0.044715
    %v962 = vmul.f32 %v701, 0.044715
    %v963 = vmul.f32 %v512, 0.044715
    %v964 = vmul.f32 %v514, 0.044715
    %v965 = vmul.f32 %v705, 0.044715
    %v966 = vmul.f32 %v707, 0.044715
    %v967 = vmul.f32 %v516, 0.044715
    %v968 = vmul.f32 %v518, 0.044715
    %v969 = vmul.f32 %v709, 0.044715
    %v970 = vmul.f32 %v711, 0.044715
    %v971 = vmul.f32 %v522, 0.044715
    %v972 = vmul.f32 %v524, 0.044715
    %v973 = vmul.f32 %v715, 0.044715
    %v974 = vmul.f32 %v717, 0.044715
    %v975 = vmul.f32 %v526, 0.044715
    %v976 = vmul.f32 %v528, 0.044715
    %v977 = vmul.f32 %v719, 0.044715
    %v978 = vmul.f32 %v721, 0.044715
    %v979 = vmul.f32 %v851, %v372
    %v980 = vmul.f32 %v852, %v374
    %v981 = vmul.f32 %v853, %v565
    %v982 = vmul.f32 %v854, %v567
    %v983 = vmul.f32 %v855, %v376
    %v984 = vmul.f32 %v856, %v378
    %v985 = vmul.f32 %v857, %v569
    %v986 = vmul.f32 %v858, %v571
    %v987 = vmul.f32 %v859, %v382
    %v988 = vmul.f32 %v860, %v384
    %v989 = vmul.f32 %v861, %v575
    %v990 = vmul.f32 %v862, %v577
    %v991 = vmul.f32 %v863, %v386
    %v992 = vmul.f32 %v864, %v388
    %v993 = vmul.f32 %v865, %v579
    %v994 = vmul.f32 %v866, %v581
    %v995 = vmul.f32 %v867, %v392
    %v996 = vmul.f32 %v868, %v394
    %v997 = vmul.f32 %v869, %v585
    %v998 = vmul.f32 %v870, %v587
    %v999 = vmul.f32 %v871, %v396
    %v1000 = vmul.f32 %v872, %v398
    %v1001 = vmul.f32 %v873, %v589
    %v1002 = vmul.f32 %v874, %v591
    %v1003 = vmul.f32 %v875, %v402
    %v1004 = vmul.f32 %v876, %v404
    %v1005 = vmul.f32 %v877, %v595
    %v1006 = vmul.f32 %v878, %v597
    %v1007 = vmul.f32 %v879, %v406
    %v1008 = vmul.f32 %v880, %v408
    %v1009 = vmul.f32 %v881, %v599
    %v1010 = vmul.f32 %v882, %v601
    %v1011 = vmul.f32 %v883, %v412
    %v1012 = vmul.f32 %v884, %v414
    %v1013 = vmul.f32 %v885, %v605
    %v1014 = vmul.f32 %v886, %v607
    %v1015 = vmul.f32 %v887, %v416
    %v1016 = vmul.f32 %v888, %v418
    %v1017 = vmul.f32 %v889, %v609
    %v1018 = vmul.f32 %v890, %v611
    %v1019 = vmul.f32 %v891, %v422
    %v1020 = vmul.f32 %v892, %v424
    %v1021 = vmul.f32 %v893, %v615
    %v1022 = vmul.f32 %v894, %v617
    %v1023 = vmul.f32 %v895, %v426
    %v1024 = vmul.f32 %v896, %v428
    %v1025 = vmul.f32 %v897, %v619
    %v1026 = vmul.f32 %v898, %v621
    %v1027 = vmul.f32 %v899, %v432
    %v1028 = vmul.f32 %v900, %v434
    %v1029 = vmul.f32 %v901, %v625
    %v1030 = vmul.f32 %v902, %v627
    %v1031 = vmul.f32 %v903, %v436
    %v1032 = vmul.f32 %v904, %v438
    %v1033 = vmul.f32 %v905, %v629
    %v1034 = vmul.f32 %v906, %v631
    %v1035 = vmul.f32 %v907, %v442
    %v1036 = vmul.f32 %v908, %v444
    %v1037 = vmul.f32 %v909, %v635
    %v1038 = vmul.f32 %v910, %v637
    %v1039 = vmul.f32 %v911, %v446
    %v1040 = vmul.f32 %v912, %v448
    %v1041 = vmul.f32 %v913, %v639
    %v1042 = vmul.f32 %v914, %v641
    %v1043 = vmul.f32 %v915, %v452
    %v1044 = vmul.f32 %v916, %v454
    %v1045 = vmul.f32 %v917, %v645
    %v1046 = vmul.f32 %v918, %v647
    %v1047 = vmul.f32 %v919, %v456
    %v1048 = vmul.f32 %v920, %v458
    %v1049 = vmul.f32 %v921, %v649
    %v1050 = vmul.f32 %v922, %v651
    %v1051 = vmul.f32 %v923, %v462
    %v1052 = vmul.f32 %v924, %v464
    %v1053 = vmul.f32 %v925, %v655
    %v1054 = vmul.f32 %v926, %v657
    %v1055 = vmul.f32 %v927, %v466
    %v1056 = vmul.f32 %v928, %v468
    %v1057 = vmul.f32 %v929, %v659
    %v1058 = vmul.f32 %v930, %v661
    %v1059 = vmul.f32 %v931, %v472
    %v1060 = vmul.f32 %v932, %v474
    %v1061 = vmul.f32 %v933, %v665
    %v1062 = vmul.f32 %v934, %v667
    %v1063 = vmul.f32 %v935, %v476
    %v1064 = vmul.f32 %v936, %v478
    %v1065 = vmul.f32 %v937, %v669
    %v1066 = vmul.f32 %v938, %v671
    %v1067 = vmul.f32 %v939, %v482
    %v1068 = vmul.f32 %v940, %v484
    %v1069 = vmul.f32 %v941, %v675
    %v1070 = vmul.f32 %v942, %v677
    %v1071 = vmul.f32 %v943, %v486
    %v1072 = vmul.f32 %v944, %v488
    %v1073 = vmul.f32 %v945, %v679
    %v1074 = vmul.f32 %v946, %v681
    %v1075 = vmul.f32 %v947, %v492
    %v1076 = vmul.f32 %v948, %v494
    %v1077 = vmul.f32 %v949, %v685
    %v1078 = vmul.f32 %v950, %v687
    %v1079 = vmul.f32 %v951, %v496
    %v1080 = vmul.f32 %v952, %v498
    %v1081 = vmul.f32 %v953, %v689
    %v1082 = vmul.f32 %v954, %v691
    %v1083 = vmul.f32 %v955, %v502
    %v1084 = vmul.f32 %v956, %v504
    %v1085 = vmul.f32 %v957, %v695
    %v1086 = vmul.f32 %v958, %v697
    %v1087 = vmul.f32 %v959, %v506
    %v1088 = vmul.f32 %v960, %v508
    %v1089 = vmul.f32 %v961, %v699
    %v1090 = vmul.f32 %v962, %v701
    %v1091 = vmul.f32 %v963, %v512
    %v1092 = vmul.f32 %v964, %v514
    %v1093 = vmul.f32 %v965, %v705
    %v1094 = vmul.f32 %v966, %v707
    %v1095 = vmul.f32 %v967, %v516
    %v1096 = vmul.f32 %v968, %v518
    %v1097 = vmul.f32 %v969, %v709
    %v1098 = vmul.f32 %v970, %v711
    %v1099 = vmul.f32 %v971, %v522
    %v1100 = vmul.f32 %v972, %v524
    %v1101 = vmul.f32 %v973, %v715
    %v1102 = vmul.f32 %v974, %v717
    %v1103 = vmul.f32 %v975, %v526
    %v1104 = vmul.f32 %v976, %v528
    %v1105 = vmul.f32 %v977, %v719
    %v1106 = vmul.f32 %v978, %v721
    %v1107 = vmul.f32 %v979, %v372
    %v1108 = vmul.f32 %v980, %v374
    %v1109 = vmul.f32 %v981, %v565
    %v1110 = vmul.f32 %v982, %v567
    %v1111 = vmul.f32 %v983, %v376
    %v1112 = vmul.f32 %v984, %v378
    %v1113 = vmul.f32 %v985, %v569
    %v1114 = vmul.f32 %v986, %v571
    %v1115 = vmul.f32 %v987, %v382
    %v1116 = vmul.f32 %v988, %v384
    %v1117 = vmul.f32 %v989, %v575
    %v1118 = vmul.f32 %v990, %v577
    %v1119 = vmul.f32 %v991, %v386
    %v1120 = vmul.f32 %v992, %v388
    %v1121 = vmul.f32 %v993, %v579
    %v1122 = vmul.f32 %v994, %v581
    %v1123 = vmul.f32 %v995, %v392
    %v1124 = vmul.f32 %v996, %v394
    %v1125 = vmul.f32 %v997, %v585
    %v1126 = vmul.f32 %v998, %v587
    %v1127 = vmul.f32 %v999, %v396
    %v1128 = vmul.f32 %v1000, %v398
    %v1129 = vmul.f32 %v1001, %v589
    %v1130 = vmul.f32 %v1002, %v591
    %v1131 = vmul.f32 %v1003, %v402
    %v1132 = vmul.f32 %v1004, %v404
    %v1133 = vmul.f32 %v1005, %v595
    %v1134 = vmul.f32 %v1006, %v597
    %v1135 = vmul.f32 %v1007, %v406
    %v1136 = vmul.f32 %v1008, %v408
    %v1137 = vmul.f32 %v1009, %v599
    %v1138 = vmul.f32 %v1010, %v601
    %v1139 = vmul.f32 %v1011, %v412
    %v1140 = vmul.f32 %v1012, %v414
    %v1141 = vmul.f32 %v1013, %v605
    %v1142 = vmul.f32 %v1014, %v607
    %v1143 = vmul.f32 %v1015, %v416
    %v1144 = vmul.f32 %v1016, %v418
    %v1145 = vmul.f32 %v1017, %v609
    %v1146 = vmul.f32 %v1018, %v611
    %v1147 = vmul.f32 %v1019, %v422
    %v1148 = vmul.f32 %v1020, %v424
    %v1149 = vmul.f32 %v1021, %v615
    %v1150 = vmul.f32 %v1022, %v617
    %v1151 = vmul.f32 %v1023, %v426
    %v1152 = vmul.f32 %v1024, %v428
    %v1153 = vmul.f32 %v1025, %v619
    %v1154 = vmul.f32 %v1026, %v621
    %v1155 = vmul.f32 %v1027, %v432
    %v1156 = vmul.f32 %v1028, %v434
    %v1157 = vmul.f32 %v1029, %v625
    %v1158 = vmul.f32 %v1030, %v627
    %v1159 = vmul.f32 %v1031, %v436
    %v1160 = vmul.f32 %v1032, %v438
    %v1161 = vmul.f32 %v1033, %v629
    %v1162 = vmul.f32 %v1034, %v631
    %v1163 = vmul.f32 %v1035, %v442
    %v1164 = vmul.f32 %v1036, %v444
    %v1165 = vmul.f32 %v1037, %v635
    %v1166 = vmul.f32 %v1038, %v637
    %v1167 = vmul.f32 %v1039, %v446
    %v1168 = vmul.f32 %v1040, %v448
    %v1169 = vmul.f32 %v1041, %v639
    %v1170 = vmul.f32 %v1042, %v641
    %v1171 = vmul.f32 %v1043, %v452
    %v1172 = vmul.f32 %v1044, %v454
    %v1173 = vmul.f32 %v1045, %v645
    %v1174 = vmul.f32 %v1046, %v647
    %v1175 = vmul.f32 %v1047, %v456
    %v1176 = vmul.f32 %v1048, %v458
    %v1177 = vmul.f32 %v1049, %v649
    %v1178 = vmul.f32 %v1050, %v651
    %v1179 = vmul.f32 %v1051, %v462
    %v1180 = vmul.f32 %v1052, %v464
    %v1181 = vmul.f32 %v1053, %v655
    %v1182 = vmul.f32 %v1054, %v657
    %v1183 = vmul.f32 %v1055, %v466
    %v1184 = vmul.f32 %v1056, %v468
    %v1185 = vmul.f32 %v1057, %v659
    %v1186 = vmul.f32 %v1058, %v661
    %v1187 = vmul.f32 %v1059, %v472
    %v1188 = vmul.f32 %v1060, %v474
    %v1189 = vmul.f32 %v1061, %v665
    %v1190 = vmul.f32 %v1062, %v667
    %v1191 = vmul.f32 %v1063, %v476
    %v1192 = vmul.f32 %v1064, %v478
    %v1193 = vmul.f32 %v1065, %v669
    %v1194 = vmul.f32 %v1066, %v671
    %v1195 = vmul.f32 %v1067, %v482
    %v1196 = vmul.f32 %v1068, %v484
    %v1197 = vmul.f32 %v1069, %v675
    %v1198 = vmul.f32 %v1070, %v677
    %v1199 = vmul.f32 %v1071, %v486
    %v1200 = vmul.f32 %v1072, %v488
    %v1201 = vmul.f32 %v1073, %v679
    %v1202 = vmul.f32 %v1074, %v681
    %v1203 = vmul.f32 %v1075, %v492
    %v1204 = vmul.f32 %v1076, %v494
    %v1205 = vmul.f32 %v1077, %v685
    %v1206 = vmul.f32 %v1078, %v687
    %v1207 = vmul.f32 %v1079, %v496
    %v1208 = vmul.f32 %v1080, %v498
    %v1209 = vmul.f32 %v1081, %v689
    %v1210 = vmul.f32 %v1082, %v691
    %v1211 = vmul.f32 %v1083, %v502
    %v1212 = vmul.f32 %v1084, %v504
    %v1213 = vmul.f32 %v1085, %v695
    %v1214 = vmul.f32 %v1086, %v697
    %v1215 = vmul.f32 %v1087, %v506
    %v1216 = vmul.f32 %v1088, %v508
    %v1217 = vmul.f32 %v1089, %v699
    %v1218 = vmul.f32 %v1090, %v701
    %v1219 = vmul.f32 %v1091, %v512
    %v1220 = vmul.f32 %v1092, %v514
    %v1221 = vmul.f32 %v1093, %v705
    %v1222 = vmul.f32 %v1094, %v707
    %v1223 = vmul.f32 %v1095, %v516
    %v1224 = vmul.f32 %v1096, %v518
    %v1225 = vmul.f32 %v1097, %v709
    %v1226 = vmul.f32 %v1098, %v711
    %v1227 = vmul.f32 %v1099, %v522
    %v1228 = vmul.f32 %v1100, %v524
    %v1229 = vmul.f32 %v1101, %v715
    %v1230 = vmul.f32 %v1102, %v717
    %v1231 = vmul.f32 %v1103, %v526
    %v1232 = vmul.f32 %v1104, %v528
    %v1233 = vmul.f32 %v1105, %v719
    %v1234 = vmul.f32 %v1106, %v721
    %v1235 = vadd.f32 %v372, %v1107
    %v1236 = vadd.f32 %v374, %v1108
    %v1237 = vadd.f32 %v565, %v1109
    %v1238 = vadd.f32 %v567, %v1110
    %v1239 = vadd.f32 %v376, %v1111
    %v1240 = vadd.f32 %v378, %v1112
    %v1241 = vadd.f32 %v569, %v1113
    %v1242 = vadd.f32 %v571, %v1114
    %v1243 = vadd.f32 %v382, %v1115
    %v1244 = vadd.f32 %v384, %v1116
    %v1245 = vadd.f32 %v575, %v1117
    %v1246 = vadd.f32 %v577, %v1118
    %v1247 = vadd.f32 %v386, %v1119
    %v1248 = vadd.f32 %v388, %v1120
    %v1249 = vadd.f32 %v579, %v1121
    %v1250 = vadd.f32 %v581, %v1122
    %v1251 = vadd.f32 %v392, %v1123
    %v1252 = vadd.f32 %v394, %v1124
    %v1253 = vadd.f32 %v585, %v1125
    %v1254 = vadd.f32 %v587, %v1126
    %v1255 = vadd.f32 %v396, %v1127
    %v1256 = vadd.f32 %v398, %v1128
    %v1257 = vadd.f32 %v589, %v1129
    %v1258 = vadd.f32 %v591, %v1130
    %v1259 = vadd.f32 %v402, %v1131
    %v1260 = vadd.f32 %v404, %v1132
    %v1261 = vadd.f32 %v595, %v1133
    %v1262 = vadd.f32 %v597, %v1134
    %v1263 = vadd.f32 %v406, %v1135
    %v1264 = vadd.f32 %v408, %v1136
    %v1265 = vadd.f32 %v599, %v1137
    %v1266 = vadd.f32 %v601, %v1138
    %v1267 = vadd.f32 %v412, %v1139
    %v1268 = vadd.f32 %v414, %v1140
    %v1269 = vadd.f32 %v605, %v1141
    %v1270 = vadd.f32 %v607, %v1142
    %v1271 = vadd.f32 %v416, %v1143
    %v1272 = vadd.f32 %v418, %v1144
    %v1273 = vadd.f32 %v609, %v1145
    %v1274 = vadd.f32 %v611, %v1146
    %v1275 = vadd.f32 %v422, %v1147
    %v1276 = vadd.f32 %v424, %v1148
    %v1277 = vadd.f32 %v615, %v1149
    %v1278 = vadd.f32 %v617, %v1150
    %v1279 = vadd.f32 %v426, %v1151
    %v1280 = vadd.f32 %v428, %v1152
    %v1281 = vadd.f32 %v619, %v1153
    %v1282 = vadd.f32 %v621, %v1154
    %v1283 = vadd.f32 %v432, %v1155
    %v1284 = vadd.f32 %v434, %v1156
    %v1285 = vadd.f32 %v625, %v1157
    %v1286 = vadd.f32 %v627, %v1158
    %v1287 = vadd.f32 %v436, %v1159
    %v1288 = vadd.f32 %v438, %v1160
    %v1289 = vadd.f32 %v629, %v1161
    %v1290 = vadd.f32 %v631, %v1162
    %v1291 = vadd.f32 %v442, %v1163
    %v1292 = vadd.f32 %v444, %v1164
    %v1293 = vadd.f32 %v635, %v1165
    %v1294 = vadd.f32 %v637, %v1166
    %v1295 = vadd.f32 %v446, %v1167
    %v1296 = vadd.f32 %v448, %v1168
    %v1297 = vadd.f32 %v639, %v1169
    %v1298 = vadd.f32 %v641, %v1170
    %v1299 = vadd.f32 %v452, %v1171
    %v1300 = vadd.f32 %v454, %v1172
    %v1301 = vadd.f32 %v645, %v1173
    %v1302 = vadd.f32 %v647, %v1174
    %v1303 = vadd.f32 %v456, %v1175
    %v1304 = vadd.f32 %v458, %v1176
    %v1305 = vadd.f32 %v649, %v1177
    %v1306 = vadd.f32 %v651, %v1178
    %v1307 = vadd.f32 %v462, %v1179
    %v1308 = vadd.f32 %v464, %v1180
    %v1309 = vadd.f32 %v655, %v1181
    %v1310 = vadd.f32 %v657, %v1182
    %v1311 = vadd.f32 %v466, %v1183
    %v1312 = vadd.f32 %v468, %v1184
    %v1313 = vadd.f32 %v659, %v1185
    %v1314 = vadd.f32 %v661, %v1186
    %v1315 = vadd.f32 %v472, %v1187
    %v1316 = vadd.f32 %v474, %v1188
    %v1317 = vadd.f32 %v665, %v1189
    %v1318 = vadd.f32 %v667, %v1190
    %v1319 = vadd.f32 %v476, %v1191
    %v1320 = vadd.f32 %v478, %v1192
    %v1321 = vadd.f32 %v669, %v1193
    %v1322 = vadd.f32 %v671, %v1194
    %v1323 = vadd.f32 %v482, %v1195
    %v1324 = vadd.f32 %v484, %v1196
    %v1325 = vadd.f32 %v675, %v1197
    %v1326 = vadd.f32 %v677, %v1198
    %v1327 = vadd.f32 %v486, %v1199
    %v1328 = vadd.f32 %v488, %v1200
    %v1329 = vadd.f32 %v679, %v1201
    %v1330 = vadd.f32 %v681, %v1202
    %v1331 = vadd.f32 %v492, %v1203
    %v1332 = vadd.f32 %v494, %v1204
    %v1333 = vadd.f32 %v685, %v1205
    %v1334 = vadd.f32 %v687, %v1206
    %v1335 = vadd.f32 %v496, %v1207
    %v1336 = vadd.f32 %v498, %v1208
    %v1337 = vadd.f32 %v689, %v1209
    %v1338 = vadd.f32 %v691, %v1210
    %v1339 = vadd.f32 %v502, %v1211
    %v1340 = vadd.f32 %v504, %v1212
    %v1341 = vadd.f32 %v695, %v1213
    %v1342 = vadd.f32 %v697, %v1214
    %v1343 = vadd.f32 %v506, %v1215
    %v1344 = vadd.f32 %v508, %v1216
    %v1345 = vadd.f32 %v699, %v1217
    %v1346 = vadd.f32 %v701, %v1218
    %v1347 = vadd.f32 %v512, %v1219
    %v1348 = vadd.f32 %v514, %v1220
    %v1349 = vadd.f32 %v705, %v1221
    %v1350 = vadd.f32 %v707, %v1222
    %v1351 = vadd.f32 %v516, %v1223
    %v1352 = vadd.f32 %v518, %v1224
    %v1353 = vadd.f32 %v709, %v1225
    %v1354 = vadd.f32 %v711, %v1226
    %v1355 = vadd.f32 %v522, %v1227
    %v1356 = vadd.f32 %v524, %v1228
    %v1357 = vadd.f32 %v715, %v1229
    %v1358 = vadd.f32 %v717, %v1230
    %v1359 = vadd.f32 %v526, %v1231
    %v1360 = vadd.f32 %v528, %v1232
    %v1361 = vadd.f32 %v719, %v1233
    %v1362 = vadd.f32 %v721, %v1234
    %v1363 = vmul.f32 %v1235, 0.7978846
    %v1364 = vmul.f32 %v1236, 0.7978846
    %v1365 = vmul.f32 %v1237, 0.7978846
    %v1366 = vmul.f32 %v1238, 0.7978846
    %v1367 = vmul.f32 %v1239, 0.7978846
    %v1368 = vmul.f32 %v1240, 0.7978846
    %v1369 = vmul.f32 %v1241, 0.7978846
    %v1370 = vmul.f32 %v1242, 0.7978846
    %v1371 = vmul.f32 %v1243, 0.7978846
    %v1372 = vmul.f32 %v1244, 0.7978846
    %v1373 = vmul.f32 %v1245, 0.7978846
    %v1374 = vmul.f32 %v1246, 0.7978846
    %v1375 = vmul.f32 %v1247, 0.7978846
    %v1376 = vmul.f32 %v1248, 0.7978846
    %v1377 = vmul.f32 %v1249, 0.7978846
    %v1378 = vmul.f32 %v1250, 0.7978846
    %v1379 = vmul.f32 %v1251, 0.7978846
    %v1380 = vmul.f32 %v1252, 0.7978846
    %v1381 = vmul.f32 %v1253, 0.7978846
    %v1382 = vmul.f32 %v1254, 0.7978846
    %v1383 = vmul.f32 %v1255, 0.7978846
    %v1384 = vmul.f32 %v1256, 0.7978846
    %v1385 = vmul.f32 %v1257, 0.7978846
    %v1386 = vmul.f32 %v1258, 0.7978846
    %v1387 = vmul.f32 %v1259, 0.7978846
    %v1388 = vmul.f32 %v1260, 0.7978846
    %v1389 = vmul.f32 %v1261, 0.7978846
    %v1390 = vmul.f32 %v1262, 0.7978846
    %v1391 = vmul.f32 %v1263, 0.7978846
    %v1392 = vmul.f32 %v1264, 0.7978846
    %v1393 = vmul.f32 %v1265, 0.7978846
    %v1394 = vmul.f32 %v1266, 0.7978846
    %v1395 = vmul.f32 %v1267, 0.7978846
    %v1396 = vmul.f32 %v1268, 0.7978846
    %v1397 = vmul.f32 %v1269, 0.7978846
    %v1398 = vmul.f32 %v1270, 0.7978846
    %v1399 = vmul.f32 %v1271, 0.7978846
    %v1400 = vmul.f32 %v1272, 0.7978846
    %v1401 = vmul.f32 %v1273, 0.7978846
    %v1402 = vmul.f32 %v1274, 0.7978846
    %v1403 = vmul.f32 %v1275, 0.7978846
    %v1404 = vmul.f32 %v1276, 0.7978846
    %v1405 = vmul.f32 %v1277, 0.7978846
    %v1406 = vmul.f32 %v1278, 0.7978846
    %v1407 = vmul.f32 %v1279, 0.7978846
    %v1408 = vmul.f32 %v1280, 0.7978846
    %v1409 = vmul.f32 %v1281, 0.7978846
    %v1410 = vmul.f32 %v1282, 0.7978846
    %v1411 = vmul.f32 %v1283, 0.7978846
    %v1412 = vmul.f32 %v1284, 0.7978846
    %v1413 = vmul.f32 %v1285, 0.7978846
    %v1414 = vmul.f32 %v1286, 0.7978846
    %v1415 = vmul.f32 %v1287, 0.7978846
    %v1416 = vmul.f32 %v1288, 0.7978846
    %v1417 = vmul.f32 %v1289, 0.7978846
    %v1418 = vmul.f32 %v1290, 0.7978846
    %v1419 = vmul.f32 %v1291, 0.7978846
    %v1420 = vmul.f32 %v1292, 0.7978846
    %v1421 = vmul.f32 %v1293, 0.7978846
    %v1422 = vmul.f32 %v1294, 0.7978846
    %v1423 = vmul.f32 %v1295, 0.7978846
    %v1424 = vmul.f32 %v1296, 0.7978846
    %v1425 = vmul.f32 %v1297, 0.7978846
    %v1426 = vmul.f32 %v1298, 0.7978846
    %v1427 = vmul.f32 %v1299, 0.7978846
    %v1428 = vmul.f32 %v1300, 0.7978846
    %v1429 = vmul.f32 %v1301, 0.7978846
    %v1430 = vmul.f32 %v1302, 0.7978846
    %v1431 = vmul.f32 %v1303, 0.7978846
    %v1432 = vmul.f32 %v1304, 0.7978846
    %v1433 = vmul.f32 %v1305, 0.7978846
    %v1434 = vmul.f32 %v1306, 0.7978846
    %v1435 = vmul.f32 %v1307, 0.7978846
    %v1436 = vmul.f32 %v1308, 0.7978846
    %v1437 = vmul.f32 %v1309, 0.7978846
    %v1438 = vmul.f32 %v1310, 0.7978846
    %v1439 = vmul.f32 %v1311, 0.7978846
    %v1440 = vmul.f32 %v1312, 0.7978846
    %v1441 = vmul.f32 %v1313, 0.7978846
    %v1442 = vmul.f32 %v1314, 0.7978846
    %v1443 = vmul.f32 %v1315, 0.7978846
    %v1444 = vmul.f32 %v1316, 0.7978846
    %v1445 = vmul.f32 %v1317, 0.7978846
    %v1446 = vmul.f32 %v1318, 0.7978846
    %v1447 = vmul.f32 %v1319, 0.7978846
    %v1448 = vmul.f32 %v1320, 0.7978846
    %v1449 = vmul.f32 %v1321, 0.7978846
    %v1450 = vmul.f32 %v1322, 0.7978846
    %v1451 = vmul.f32 %v1323, 0.7978846
    %v1452 = vmul.f32 %v1324, 0.7978846
    %v1453 = vmul.f32 %v1325, 0.7978846
    %v1454 = vmul.f32 %v1326, 0.7978846
    %v1455 = vmul.f32 %v1327, 0.7978846
    %v1456 = vmul.f32 %v1328, 0.7978846
    %v1457 = vmul.f32 %v1329, 0.7978846
    %v1458 = vmul.f32 %v1330, 0.7978846
    %v1459 = vmul.f32 %v1331, 0.7978846
    %v1460 = vmul.f32 %v1332, 0.7978846
    %v1461 = vmul.f32 %v1333, 0.7978846
    %v1462 = vmul.f32 %v1334, 0.7978846
    %v1463 = vmul.f32 %v1335, 0.7978846
    %v1464 = vmul.f32 %v1336, 0.7978846
    %v1465 = vmul.f32 %v1337, 0.7978846
    %v1466 = vmul.f32 %v1338, 0.7978846
    %v1467 = vmul.f32 %v1339, 0.7978846
    %v1468 = vmul.f32 %v1340, 0.7978846
    %v1469 = vmul.f32 %v1341, 0.7978846
    %v1470 = vmul.f32 %v1342, 0.7978846
    %v1471 = vmul.f32 %v1343, 0.7978846
    %v1472 = vmul.f32 %v1344, 0.7978846
    %v1473 = vmul.f32 %v1345, 0.7978846
    %v1474 = vmul.f32 %v1346, 0.7978846
    %v1475 = vmul.f32 %v1347, 0.7978846
    %v1476 = vmul.f32 %v1348, 0.7978846
    %v1477 = vmul.f32 %v1349, 0.7978846
    %v1478 = vmul.f32 %v1350, 0.7978846
    %v1479 = vmul.f32 %v1351, 0.7978846
    %v1480 = vmul.f32 %v1352, 0.7978846
    %v1481 = vmul.f32 %v1353, 0.7978846
    %v1482 = vmul.f32 %v1354, 0.7978846
    %v1483 = vmul.f32 %v1355, 0.7978846
    %v1484 = vmul.f32 %v1356, 0.7978846
    %v1485 = vmul.f32 %v1357, 0.7978846
    %v1486 = vmul.f32 %v1358, 0.7978846
    %v1487 = vmul.f32 %v1359, 0.7978846
    %v1488 = vmul.f32 %v1360, 0.7978846
    %v1489 = vmul.f32 %v1361, 0.7978846
    %v1490 = vmul.f32 %v1362, 0.7978846
    %v1491 = vtanh.pop %v1363
    %v1492 = vtanh.pop %v1364
    %v1493 = vtanh.pop %v1365
    %v1494 = vtanh.pop %v1366
    %v1495 = vtanh.pop %v1367
    %v1496 = vtanh.pop %v1368
    %v1497 = vtanh.pop %v1369
    %v1498 = vtanh.pop %v1370
    %v1499 = vtanh.pop %v1371
    %v1500 = vtanh.pop %v1372
    %v1501 = vtanh.pop %v1373
    %v1502 = vtanh.pop %v1374
    %v1503 = vtanh.pop %v1375
    %v1504 = vtanh.pop %v1376
    %v1505 = vtanh.pop %v1377
    %v1506 = vtanh.pop %v1378
    %v1507 = vtanh.pop %v1379
    %v1508 = vtanh.pop %v1380
    %v1509 = vtanh.pop %v1381
    %v1510 = vtanh.pop %v1382
    %v1511 = vtanh.pop %v1383
    %v1512 = vtanh.pop %v1384
    %v1513 = vtanh.pop %v1385
    %v1514 = vtanh.pop %v1386
    %v1515 = vtanh.pop %v1387
    %v1516 = vtanh.pop %v1388
    %v1517 = vtanh.pop %v1389
    %v1518 = vtanh.pop %v1390
    %v1519 = vtanh.pop %v1391
    %v1520 = vtanh.pop %v1392
    %v1521 = vtanh.pop %v1393
    %v1522 = vtanh.pop %v1394
    %v1523 = vtanh.pop %v1395
    %v1524 = vtanh.pop %v1396
    %v1525 = vtanh.pop %v1397
    %v1526 = vtanh.pop %v1398
    %v1527 = vtanh.pop %v1399
    %v1528 = vtanh.pop %v1400
    %v1529 = vtanh.pop %v1401
    %v1530 = vtanh.pop %v1402
    %v1531 = vtanh.pop %v1403
    %v1532 = vtanh.pop %v1404
    %v1533 = vtanh.pop %v1405
    %v1534 = vtanh.pop %v1406
    %v1535 = vtanh.pop %v1407
    %v1536 = vtanh.pop %v1408
    %v1537 = vtanh.pop %v1409
    %v1538 = vtanh.pop %v1410
    %v1539 = vtanh.pop %v1411
    %v1540 = vtanh.pop %v1412
    %v1541 = vtanh.pop %v1413
    %v1542 = vtanh.pop %v1414
    %v1543 = vtanh.pop %v1415
    %v1544 = vtanh.pop %v1416
    %v1545 = vtanh.pop %v1417
    %v1546 = vtanh.pop %v1418
    %v1547 = vtanh.pop %v1419
    %v1548 = vtanh.pop %v1420
    %v1549 = vtanh.pop %v1421
    %v1550 = vtanh.pop %v1422
    %v1551 = vtanh.pop %v1423
    %v1552 = vtanh.pop %v1424
    %v1553 = vtanh.pop %v1425
    %v1554 = vtanh.pop %v1426
    %v1555 = vtanh.pop %v1427
    %v1556 = vtanh.pop %v1428
    %v1557 = vtanh.pop %v1429
    %v1558 = vtanh.pop %v1430
    %v1559 = vtanh.pop %v1431
    %v1560 = vtanh.pop %v1432
    %v1561 = vtanh.pop %v1433
    %v1562 = vtanh.pop %v1434
    %v1563 = vtanh.pop %v1435
    %v1564 = vtanh.pop %v1436
    %v1565 = vtanh.pop %v1437
    %v1566 = vtanh.pop %v1438
    %v1567 = vtanh.pop %v1439
    %v1568 = vtanh.pop %v1440
    %v1569 = vtanh.pop %v1441
    %v1570 = vtanh.pop %v1442
    %v1571 = vtanh.pop %v1443
    %v1572 = vtanh.pop %v1444
    %v1573 = vtanh.pop %v1445
    %v1574 = vtanh.pop %v1446
    %v1575 = vtanh.pop %v1447
    %v1576 = vtanh.pop %v1448
    %v1577 = vtanh.pop %v1449
    %v1578 = vtanh.pop %v1450
    %v1579 = vtanh.pop %v1451
    %v1580 = vtanh.pop %v1452
    %v1581 = vtanh.pop %v1453
    %v1582 = vtanh.pop %v1454
    %v1583 = vtanh.pop %v1455
    %v1584 = vtanh.pop %v1456
    %v1585 = vtanh.pop %v1457
    %v1586 = vtanh.pop %v1458
    %v1587 = vtanh.pop %v1459
    %v1588 = vtanh.pop %v1460
    %v1589 = vtanh.pop %v1461
    %v1590 = vtanh.pop %v1462
    %v1591 = vtanh.pop %v1463
    %v1592 = vtanh.pop %v1464
    %v1593 = vtanh.pop %v1465
    %v1594 = vtanh.pop %v1466
    %v1595 = vtanh.pop %v1467
    %v1596 = vtanh.pop %v1468
    %v1597 = vtanh.pop %v1469
    %v1598 = vtanh.pop %v1470
    %v1599 = vtanh.pop %v1471
    %v1600 = vtanh.pop %v1472
    %v1601 = vtanh.pop %v1473
    %v1602 = vtanh.pop %v1474
    %v1603 = vtanh.pop %v1475
    %v1604 = vtanh.pop %v1476
    %v1605 = vtanh.pop %v1477
    %v1606 = vtanh.pop %v1478
    %v1607 = vtanh.pop %v1479
    %v1608 = vtanh.pop %v1480
    %v1609 = vtanh.pop %v1481
    %v1610 = vtanh.pop %v1482
    %v1611 = vtanh.pop %v1483
    %v1612 = vtanh.pop %v1484
    %v1613 = vtanh.pop %v1485
    %v1614 = vtanh.pop %v1486
    %v1615 = vtanh.pop %v1487
    %v1616 = vtanh.pop %v1488
    %v1617 = vtanh.pop %v1489
    %v1618 = vtanh.pop %v1490
    %v1619 = vadd.f32 %v1491, 1.0
    %v1620 = vadd.f32 %v1492, 1.0
    %v1621 = vadd.f32 %v1493, 1.0
    %v1622 = vadd.f32 %v1494, 1.0
    %v1623 = vadd.f32 %v1495, 1.0
    %v1624 = vadd.f32 %v1496, 1.0
    %v1625 = vadd.f32 %v1497, 1.0
    %v1626 = vadd.f32 %v1498, 1.0
    %v1627 = vadd.f32 %v1499, 1.0
    %v1628 = vadd.f32 %v1500, 1.0
    %v1629 = vadd.f32 %v1501, 1.0
    %v1630 = vadd.f32 %v1502, 1.0
    %v1631 = vadd.f32 %v1503, 1.0
    %v1632 = vadd.f32 %v1504, 1.0
    %v1633 = vadd.f32 %v1505, 1.0
    %v1634 = vadd.f32 %v1506, 1.0
    %v1635 = vadd.f32 %v1507, 1.0
    %v1636 = vadd.f32 %v1508, 1.0
    %v1637 = vadd.f32 %v1509, 1.0
    %v1638 = vadd.f32 %v1510, 1.0
    %v1639 = vadd.f32 %v1511, 1.0
    %v1640 = vadd.f32 %v1512, 1.0
    %v1641 = vadd.f32 %v1513, 1.0
    %v1642 = vadd.f32 %v1514, 1.0
    %v1643 = vadd.f32 %v1515, 1.0
    %v1644 = vadd.f32 %v1516, 1.0
    %v1645 = vadd.f32 %v1517, 1.0
    %v1646 = vadd.f32 %v1518, 1.0
    %v1647 = vadd.f32 %v1519, 1.0
    %v1648 = vadd.f32 %v1520, 1.0
    %v1649 = vadd.f32 %v1521, 1.0
    %v1650 = vadd.f32 %v1522, 1.0
    %v1651 = vadd.f32 %v1523, 1.0
    %v1652 = vadd.f32 %v1524, 1.0
    %v1653 = vadd.f32 %v1525, 1.0
    %v1654 = vadd.f32 %v1526, 1.0
    %v1655 = vadd.f32 %v1527, 1.0
    %v1656 = vadd.f32 %v1528, 1.0
    %v1657 = vadd.f32 %v1529, 1.0
    %v1658 = vadd.f32 %v1530, 1.0
    %v1659 = vadd.f32 %v1531, 1.0
    %v1660 = vadd.f32 %v1532, 1.0
    %v1661 = vadd.f32 %v1533, 1.0
    %v1662 = vadd.f32 %v1534, 1.0
    %v1663 = vadd.f32 %v1535, 1.0
    %v1664 = vadd.f32 %v1536, 1.0
    %v1665 = vadd.f32 %v1537, 1.0
    %v1666 = vadd.f32 %v1538, 1.0
    %v1667 = vadd.f32 %v1539, 1.0
    %v1668 = vadd.f32 %v1540, 1.0
    %v1669 = vadd.f32 %v1541, 1.0
    %v1670 = vadd.f32 %v1542, 1.0
    %v1671 = vadd.f32 %v1543, 1.0
    %v1672 = vadd.f32 %v1544, 1.0
    %v1673 = vadd.f32 %v1545, 1.0
    %v1674 = vadd.f32 %v1546, 1.0
    %v1675 = vadd.f32 %v1547, 1.0
    %v1676 = vadd.f32 %v1548, 1.0
    %v1677 = vadd.f32 %v1549, 1.0
    %v1678 = vadd.f32 %v1550, 1.0
    %v1679 = vadd.f32 %v1551, 1.0
    %v1680 = vadd.f32 %v1552, 1.0
    %v1681 = vadd.f32 %v1553, 1.0
    %v1682 = vadd.f32 %v1554, 1.0
    %v1683 = vadd.f32 %v1555, 1.0
    %v1684 = vadd.f32 %v1556, 1.0
    %v1685 = vadd.f32 %v1557, 1.0
    %v1686 = vadd.f32 %v1558, 1.0
    %v1687 = vadd.f32 %v1559, 1.0
    %v1688 = vadd.f32 %v1560, 1.0
    %v1689 = vadd.f32 %v1561, 1.0
    %v1690 = vadd.f32 %v1562, 1.0
    %v1691 = vadd.f32 %v1563, 1.0
    %v1692 = vadd.f32 %v1564, 1.0
    %v1693 = vadd.f32 %v1565, 1.0
    %v1694 = vadd.f32 %v1566, 1.0
    %v1695 = vadd.f32 %v1567, 1.0
    %v1696 = vadd.f32 %v1568, 1.0
    %v1697 = vadd.f32 %v1569, 1.0
    %v1698 = vadd.f32 %v1570, 1.0
    %v1699 = vadd.f32 %v1571, 1.0
    %v1700 = vadd.f32 %v1572, 1.0
    %v1701 = vadd.f32 %v1573, 1.0
    %v1702 = vadd.f32 %v1574, 1.0
    %v1703 = vadd.f32 %v1575, 1.0
    %v1704 = vadd.f32 %v1576, 1.0
    %v1705 = vadd.f32 %v1577, 1.0
    %v1706 = vadd.f32 %v1578, 1.0
    %v1707 = vadd.f32 %v1579, 1.0
    %v1708 = vadd.f32 %v1580, 1.0
    %v1709 = vadd.f32 %v1581, 1.0
    %v1710 = vadd.f32 %v1582, 1.0
    %v1711 = vadd.f32 %v1583, 1.0
    %v1712 = vadd.f32 %v1584, 1.0
    %v1713 = vadd.f32 %v1585, 1.0
    %v1714 = vadd.f32 %v1586, 1.0
    %v1715 = vadd.f32 %v1587, 1.0
    %v1716 = vadd.f32 %v1588, 1.0
    %v1717 = vadd.f32 %v1589, 1.0
    %v1718 = vadd.f32 %v1590, 1.0
    %v1719 = vadd.f32 %v1591, 1.0
    %v1720 = vadd.f32 %v1592, 1.0
    %v1721 = vadd.f32 %v1593, 1.0
    %v1722 = vadd.f32 %v1594, 1.0
    %v1723 = vadd.f32 %v1595, 1.0
    %v1724 = vadd.f32 %v1596, 1.0
    %v1725 = vadd.f32 %v1597, 1.0
    %v1726 = vadd.f32 %v1598, 1.0
    %v1727 = vadd.f32 %v1599, 1.0
    %v1728 = vadd.f32 %v1600, 1.0
    %v1729 = vadd.f32 %v1601, 1.0
    %v1730 = vadd.f32 %v1602, 1.0
    %v1731 = vadd.f32 %v1603, 1.0
    %v1732 = vadd.f32 %v1604, 1.0
    %v1733 = vadd.f32 %v1605, 1.0
    %v1734 = vadd.f32 %v1606, 1.0
    %v1735 = vadd.f32 %v1607, 1.0
    %v1736 = vadd.f32 %v1608, 1.0
    %v1737 = vadd.f32 %v1609, 1.0
    %v1738 = vadd.f32 %v1610, 1.0
    %v1739 = vadd.f32 %v1611, 1.0
    %v1740 = vadd.f32 %v1612, 1.0
    %v1741 = vadd.f32 %v1613, 1.0
    %v1742 = vadd.f32 %v1614, 1.0
    %v1743 = vadd.f32 %v1615, 1.0
    %v1744 = vadd.f32 %v1616, 1.0
    %v1745 = vadd.f32 %v1617, 1.0
    %v1746 = vadd.f32 %v1618, 1.0
    %v1747 = vmul.f32 %v723, %v1619
    %v1748 = vmul.f32 %v724, %v1620
    %v1749 = vmul.f32 %v725, %v1621
    %v1750 = vmul.f32 %v726, %v1622
    %v1751 = vmul.f32 %v727, %v1623
    %v1752 = vmul.f32 %v728, %v1624
    %v1753 = vmul.f32 %v729, %v1625
    %v1754 = vmul.f32 %v730, %v1626
    %v1755 = vmul.f32 %v731, %v1627
    %v1756 = vmul.f32 %v732, %v1628
    %v1757 = vmul.f32 %v733, %v1629
    %v1758 = vmul.f32 %v734, %v1630
    %v1759 = vmul.f32 %v735, %v1631
    %v1760 = vmul.f32 %v736, %v1632
    %v1761 = vmul.f32 %v737, %v1633
    %v1762 = vmul.f32 %v738, %v1634
    %v1763 = vmul.f32 %v739, %v1635
    %v1764 = vmul.f32 %v740, %v1636
    %v1765 = vmul.f32 %v741, %v1637
    %v1766 = vmul.f32 %v742, %v1638
    %v1767 = vmul.f32 %v743, %v1639
    %v1768 = vmul.f32 %v744, %v1640
    %v1769 = vmul.f32 %v745, %v1641
    %v1770 = vmul.f32 %v746, %v1642
    %v1771 = vmul.f32 %v747, %v1643
    %v1772 = vmul.f32 %v748, %v1644
    %v1773 = vmul.f32 %v749, %v1645
    %v1774 = vmul.f32 %v750, %v1646
    %v1775 = vmul.f32 %v751, %v1647
    %v1776 = vmul.f32 %v752, %v1648
    %v1777 = vmul.f32 %v753, %v1649
    %v1778 = vmul.f32 %v754, %v1650
    %v1779 = vmul.f32 %v755, %v1651
    %v1780 = vmul.f32 %v756, %v1652
    %v1781 = vmul.f32 %v757, %v1653
    %v1782 = vmul.f32 %v758, %v1654
    %v1783 = vmul.f32 %v759, %v1655
    %v1784 = vmul.f32 %v760, %v1656
    %v1785 = vmul.f32 %v761, %v1657
    %v1786 = vmul.f32 %v762, %v1658
    %v1787 = vmul.f32 %v763, %v1659
    %v1788 = vmul.f32 %v764, %v1660
    %v1789 = vmul.f32 %v765, %v1661
    %v1790 = vmul.f32 %v766, %v1662
    %v1791 = vmul.f32 %v767, %v1663
    %v1792 = vmul.f32 %v768, %v1664
    %v1793 = vmul.f32 %v769, %v1665
    %v1794 = vmul.f32 %v770, %v1666
    %v1795 = vmul.f32 %v771, %v1667
    %v1796 = vmul.f32 %v772, %v1668
    %v1797 = vmul.f32 %v773, %v1669
    %v1798 = vmul.f32 %v774, %v1670
    %v1799 = vmul.f32 %v775, %v1671
    %v1800 = vmul.f32 %v776, %v1672
    %v1801 = vmul.f32 %v777, %v1673
    %v1802 = vmul.f32 %v778, %v1674
    %v1803 = vmul.f32 %v779, %v1675
    %v1804 = vmul.f32 %v780, %v1676
    %v1805 = vmul.f32 %v781, %v1677
    %v1806 = vmul.f32 %v782, %v1678
    %v1807 = vmul.f32 %v783, %v1679
    %v1808 = vmul.f32 %v784, %v1680
    %v1809 = vmul.f32 %v785, %v1681
    %v1810 = vmul.f32 %v786, %v1682
    %v1811 = vmul.f32 %v787, %v1683
    %v1812 = vmul.f32 %v788, %v1684
    %v1813 = vmul.f32 %v789, %v1685
    %v1814 = vmul.f32 %v790, %v1686
    %v1815 = vmul.f32 %v791, %v1687
    %v1816 = vmul.f32 %v792, %v1688
    %v1817 = vmul.f32 %v793, %v1689
    %v1818 = vmul.f32 %v794, %v1690
    %v1819 = vmul.f32 %v795, %v1691
    %v1820 = vmul.f32 %v796, %v1692
    %v1821 = vmul.f32 %v797, %v1693
    %v1822 = vmul.f32 %v798, %v1694
    %v1823 = vmul.f32 %v799, %v1695
    %v1824 = vmul.f32 %v800, %v1696
    %v1825 = vmul.f32 %v801, %v1697
    %v1826 = vmul.f32 %v802, %v1698
    %v1827 = vmul.f32 %v803, %v1699
    %v1828 = vmul.f32 %v804, %v1700
    %v1829 = vmul.f32 %v805, %v1701
    %v1830 = vmul.f32 %v806, %v1702
    %v1831 = vmul.f32 %v807, %v1703
    %v1832 = vmul.f32 %v808, %v1704
    %v1833 = vmul.f32 %v809, %v1705
    %v1834 = vmul.f32 %v810, %v1706
    %v1835 = vmul.f32 %v811, %v1707
    %v1836 = vmul.f32 %v812, %v1708
    %v1837 = vmul.f32 %v813, %v1709
    %v1838 = vmul.f32 %v814, %v1710
    %v1839 = vmul.f32 %v815, %v1711
    %v1840 = vmul.f32 %v816, %v1712
    %v1841 = vmul.f32 %v817, %v1713
    %v1842 = vmul.f32 %v818, %v1714
    %v1843 = vmul.f32 %v819, %v1715
    %v1844 = vmul.f32 %v820, %v1716
    %v1845 = vmul.f32 %v821, %v1717
    %v1846 = vmul.f32 %v822, %v1718
    %v1847 = vmul.f32 %v823, %v1719
    %v1848 = vmul.f32 %v824, %v1720
    %v1849 = vmul.f32 %v825, %v1721
    %v1850 = vmul.f32 %v826, %v1722
    %v1851 = vmul.f32 %v827, %v1723
    %v1852 = vmul.f32 %v828, %v1724
    %v1853 = vmul.f32 %v829, %v1725
    %v1854 = vmul.f32 %v830, %v1726
    %v1855 = vmul.f32 %v831, %v1727
    %v1856 = vmul.f32 %v832, %v1728
    %v1857 = vmul.f32 %v833, %v1729
    %v1858 = vmul.f32 %v834, %v1730
    %v1859 = vmul.f32 %v835, %v1731
    %v1860 = vmul.f32 %v836, %v1732
    %v1861 = vmul.f32 %v837, %v1733
    %v1862 = vmul.f32 %v838, %v1734
    %v1863 = vmul.f32 %v839, %v1735
    %v1864 = vmul.f32 %v840, %v1736
    %v1865 = vmul.f32 %v841, %v1737
    %v1866 = vmul.f32 %v842, %v1738
    %v1867 = vmul.f32 %v843, %v1739
    %v1868 = vmul.f32 %v844, %v1740
    %v1869 = vmul.f32 %v845, %v1741
    %v1870 = vmul.f32 %v846, %v1742
    %v1871 = vmul.f32 %v847, %v1743
    %v1872 = vmul.f32 %v848, %v1744
    %v1873 = vmul.f32 %v849, %v1745
    %v1874 = vmul.f32 %v850, %v1746
    %v1875 = vpack.c.bf16 %v1751, %v1747
    %v1876 = vpack.c.bf16 %v1752, %v1748
    %v1877 = vpack.c.bf16 %v1753, %v1749
    %v1878 = vpack.c.bf16 %v1754, %v1750
    %v1879 = vpack.c.bf16 %v1759, %v1755
    %v1880 = vpack.c.bf16 %v1760, %v1756
    %v1881 = vpack.c.bf16 %v1761, %v1757
    %v1882 = vpack.c.bf16 %v1762, %v1758
    %v1883 = vpack.c.bf16 %v1767, %v1763
    %v1884 = vpack.c.bf16 %v1768, %v1764
    %v1885 = vpack.c.bf16 %v1769, %v1765
    %v1886 = vpack.c.bf16 %v1770, %v1766
    %v1887 = vpack.c.bf16 %v1775, %v1771
    %v1888 = vpack.c.bf16 %v1776, %v1772
    %v1889 = vpack.c.bf16 %v1777, %v1773
    %v1890 = vpack.c.bf16 %v1778, %v1774
    %v1891 = vpack.c.bf16 %v1783, %v1779
    %v1892 = vpack.c.bf16 %v1784, %v1780
    %v1893 = vpack.c.bf16 %v1785, %v1781
    %v1894 = vpack.c.bf16 %v1786, %v1782
    %v1895 = vpack.c.bf16 %v1791, %v1787
    %v1896 = vpack.c.bf16 %v1792, %v1788
    %v1897 = vpack.c.bf16 %v1793, %v1789
    %v1898 = vpack.c.bf16 %v1794, %v1790
    %v1899 = vpack.c.bf16 %v1799, %v1795
    %v1900 = vpack.c.bf16 %v1800, %v1796
    %v1901 = vpack.c.bf16 %v1801, %v1797
    %v1902 = vpack.c.bf16 %v1802, %v1798
    %v1903 = vpack.c.bf16 %v1807, %v1803
    %v1904 = vpack.c.bf16 %v1808, %v1804
    %v1905 = vpack.c.bf16 %v1809, %v1805
    %v1906 = vpack.c.bf16 %v1810, %v1806
    %v1907 = vpack.c.bf16 %v1815, %v1811
    %v1908 = vpack.c.bf16 %v1816, %v1812
    %v1909 = vpack.c.bf16 %v1817, %v1813
    %v1910 = vpack.c.bf16 %v1818, %v1814
    %v1911 = vpack.c.bf16 %v1823, %v1819
    %v1912 = vpack.c.bf16 %v1824, %v1820
    %v1913 = vpack.c.bf16 %v1825, %v1821
    %v1914 = vpack.c.bf16 %v1826, %v1822
    %v1915 = vpack.c.bf16 %v1831, %v1827
    %v1916 = vpack.c.bf16 %v1832, %v1828
    %v1917 = vpack.c.bf16 %v1833, %v1829
    %v1918 = vpack.c.bf16 %v1834, %v1830
    %v1919 = vpack.c.bf16 %v1839, %v1835
    %v1920 = vpack.c.bf16 %v1840, %v1836
    %v1921 = vpack.c.bf16 %v1841, %v1837
    %v1922 = vpack.c.bf16 %v1842, %v1838
    %v1923 = vpack.c.bf16 %v1847, %v1843
    %v1924 = vpack.c.bf16 %v1848, %v1844
    %v1925 = vpack.c.bf16 %v1849, %v1845
    %v1926 = vpack.c.bf16 %v1850, %v1846
    %v1927 = vpack.c.bf16 %v1855, %v1851
    %v1928 = vpack.c.bf16 %v1856, %v1852
    %v1929 = vpack.c.bf16 %v1857, %v1853
    %v1930 = vpack.c.bf16 %v1858, %v1854
    %v1931 = vpack.c.bf16 %v1863, %v1859
    %v1932 = vpack.c.bf16 %v1864, %v1860
    %v1933 = vpack.c.bf16 %v1865, %v1861
    %v1934 = vpack.c.bf16 %v1866, %v1862
    %v1935 = vpack.c.bf16 %v1871, %v1867
    %v1936 = vpack.c.bf16 %v1872, %v1868
    %v1937 = vpack.c.bf16 %v1873, %v1869
    %v1938 = vpack.c.bf16 %v1874, %v1870
    %v1939 = vld [vmem:[#allocation8] sm:$0xf]
    %v1940 = vld [vmem:[#allocation8 + $0x4] sm:$0xf]
    %v1941 = vld [vmem:[#allocation8 + $0x8] sm:$0xf]
    %v1942 = vld [vmem:[#allocation8 + $0xc] sm:$0xf]
    %v1943 = vld [vmem:[#allocation8 + $0x10] sm:$0xf]
    %v1944 = vld [vmem:[#allocation8 + $0x14] sm:$0xf]
    %v1945 = vld [vmem:[#allocation8 + $0x18] sm:$0xf]
    %v1946 = vld [vmem:[#allocation8 + $0x1c] sm:$0xf]
    %v1947 = vld [vmem:[#allocation8 + $0x20] sm:$0xf]
    %v1948 = vld [vmem:[#allocation8 + $0x24] sm:$0xf]
    %v1949 = vld [vmem:[#allocation8 + $0x28] sm:$0xf]
    %v1950 = vld [vmem:[#allocation8 + $0x2c] sm:$0xf]
    %v1951 = vld [vmem:[#allocation8 + $0x30] sm:$0xf]
    %v1952 = vld [vmem:[#allocation8 + $0x34] sm:$0xf]
    %v1953 = vld [vmem:[#allocation8 + $0x38] sm:$0xf]
    %v1954 = vld [vmem:[#allocation8 + $0x3c] sm:$0xf]
    %v1955 = vld [vmem:[#allocation8 + $0x40] sm:$0xf]
    %v1956 = vld [vmem:[#allocation8 + $0x44] sm:$0xf]
    %v1957 = vld [vmem:[#allocation8 + $0x48] sm:$0xf]
    %v1958 = vld [vmem:[#allocation8 + $0x4c] sm:$0xf]
    %v1959 = vld [vmem:[#allocation8 + $0x50] sm:$0xf]
    %v1960 = vld [vmem:[#allocation8 + $0x54] sm:$0xf]
    %v1961 = vld [vmem:[#allocation8 + $0x58] sm:$0xf]
    %v1962 = vld [vmem:[#allocation8 + $0x5c] sm:$0xf]
    %v1963 = vld [vmem:[#allocation8 + $0x60] sm:$0xf]
    %v1964 = vld [vmem:[#allocation8 + $0x64] sm:$0xf]
    %v1965 = vld [vmem:[#allocation8 + $0x68] sm:$0xf]
    %v1966 = vld [vmem:[#allocation8 + $0x6c] sm:$0xf]
    %v1967 = vld [vmem:[#allocation8 + $0x70] sm:$0xf]
    %v1968 = vld [vmem:[#allocation8 + $0x74] sm:$0xf]
    %v1969 = vld [vmem:[#allocation8 + $0x78] sm:$0xf]
    %v1970 = vld [vmem:[#allocation8 + $0x7c] sm:$0xf]
    %v1971 = vld [vmem:[#allocation8 + $0x80] sm:$0xf]
    %v1972 = vld [vmem:[#allocation8 + $0x84] sm:$0xf]
    %v1973 = vld [vmem:[#allocation8 + $0x88] sm:$0xf]
    %v1974 = vld [vmem:[#allocation8 + $0x8c] sm:$0xf]
    %v1975 = vld [vmem:[#allocation8 + $0x90] sm:$0xf]
    %v1976 = vld [vmem:[#allocation8 + $0x94] sm:$0xf]
    %v1977 = vld [vmem:[#allocation8 + $0x98] sm:$0xf]
    %v1978 = vld [vmem:[#allocation8 + $0x9c] sm:$0xf]
    %v1979 = vld [vmem:[#allocation8 + $0xa0] sm:$0xf]
    %v1980 = vld [vmem:[#allocation8 + $0xa4] sm:$0xf]
    %v1981 = vld [vmem:[#allocation8 + $0xa8] sm:$0xf]
    %v1982 = vld [vmem:[#allocation8 + $0xac] sm:$0xf]
    %v1983 = vld [vmem:[#allocation8 + $0xb0] sm:$0xf]
    %v1984 = vld [vmem:[#allocation8 + $0xb4] sm:$0xf]
    %v1985 = vld [vmem:[#allocation8 + $0xb8] sm:$0xf]
    %v1986 = vld [vmem:[#allocation8 + $0xbc] sm:$0xf]
    %v1987 = vld [vmem:[#allocation8 + $0xc0] sm:$0xf]
    %v1988 = vld [vmem:[#allocation8 + $0xc4] sm:$0xf]
    %v1989 = vld [vmem:[#allocation8 + $0xc8] sm:$0xf]
    %v1990 = vld [vmem:[#allocation8 + $0xcc] sm:$0xf]
    %v1991 = vld [vmem:[#allocation8 + $0xd0] sm:$0xf]
    %v1992 = vld [vmem:[#allocation8 + $0xd4] sm:$0xf]
    %v1993 = vld [vmem:[#allocation8 + $0xd8] sm:$0xf]
    %v1994 = vld [vmem:[#allocation8 + $0xdc] sm:$0xf]
    %v1995 = vld [vmem:[#allocation8 + $0xe0] sm:$0xf]
    %v1996 = vld [vmem:[#allocation8 + $0xe4] sm:$0xf]
    %v1997 = vld [vmem:[#allocation8 + $0xe8] sm:$0xf]
    %v1998 = vld [vmem:[#allocation8 + $0xec] sm:$0xf]
    %v1999 = vld [vmem:[#allocation8 + $0xf0] sm:$0xf]
    %v2000 = vld [vmem:[#allocation8 + $0xf4] sm:$0xf]
    %v2001 = vld [vmem:[#allocation8 + $0xf8] sm:$0xf]
    %v2002 = vld [vmem:[#allocation8 + $0xfc] sm:$0xf]
    %v2003 = vld [vmem:[%s4] sm:$0x1]
    %v2005 = vlaneseq
    %v2006 = vshrl.u32 %v2005, 7
    %v2007 = vsub.s32 0, %v2006
    %v2008 = vrot.slane %v2003, %v2007
    %v2074 = vunpack.c.l.b16 %v1939
    %v2075 = vunpack.c.l.b16 %v1940
    %v2076 = vunpack.c.l.b16 %v1941
    %v2077 = vunpack.c.l.b16 %v1942
    %v2078 = vunpack.c.l.b16 %v1943
    %v2079 = vunpack.c.l.b16 %v1944
    %v2080 = vunpack.c.l.b16 %v1945
    %v2081 = vunpack.c.l.b16 %v1946
    %v2082 = vunpack.c.l.b16 %v1947
    %v2083 = vunpack.c.l.b16 %v1948
    %v2084 = vunpack.c.l.b16 %v1949
    %v2085 = vunpack.c.l.b16 %v1950
    %v2086 = vunpack.c.l.b16 %v1951
    %v2087 = vunpack.c.l.b16 %v1952
    %v2088 = vunpack.c.l.b16 %v1953
    %v2089 = vunpack.c.l.b16 %v1954
    %v2090 = vunpack.c.l.b16 %v1955
    %v2091 = vunpack.c.l.b16 %v1956
    %v2092 = vunpack.c.l.b16 %v1957
    %v2093 = vunpack.c.l.b16 %v1958
    %v2094 = vunpack.c.l.b16 %v1959
    %v2095 = vunpack.c.l.b16 %v1960
    %v2096 = vunpack.c.l.b16 %v1961
    %v2097 = vunpack.c.l.b16 %v1962
    %v2098 = vunpack.c.l.b16 %v1963
    %v2099 = vunpack.c.l.b16 %v1964
    %v2100 = vunpack.c.l.b16 %v1965
    %v2101 = vunpack.c.l.b16 %v1966
    %v2102 = vunpack.c.l.b16 %v1967
    %v2103 = vunpack.c.l.b16 %v1968
    %v2104 = vunpack.c.l.b16 %v1969
    %v2105 = vunpack.c.l.b16 %v1970
    %v2106 = vunpack.c.l.b16 %v1971
    %v2107 = vunpack.c.l.b16 %v1972
    %v2108 = vunpack.c.l.b16 %v1973
    %v2109 = vunpack.c.l.b16 %v1974
    %v2110 = vunpack.c.l.b16 %v1975
    %v2111 = vunpack.c.l.b16 %v1976
    %v2112 = vunpack.c.l.b16 %v1977
    %v2113 = vunpack.c.l.b16 %v1978
    %v2114 = vunpack.c.l.b16 %v1979
    %v2115 = vunpack.c.l.b16 %v1980
    %v2116 = vunpack.c.l.b16 %v1981
    %v2117 = vunpack.c.l.b16 %v1982
    %v2118 = vunpack.c.l.b16 %v1983
    %v2119 = vunpack.c.l.b16 %v1984
    %v2120 = vunpack.c.l.b16 %v1985
    %v2121 = vunpack.c.l.b16 %v1986
    %v2122 = vunpack.c.l.b16 %v1987
    %v2123 = vunpack.c.l.b16 %v1988
    %v2124 = vunpack.c.l.b16 %v1989
    %v2125 = vunpack.c.l.b16 %v1990
    %v2126 = vunpack.c.l.b16 %v1991
    %v2127 = vunpack.c.l.b16 %v1992
    %v2128 = vunpack.c.l.b16 %v1993
    %v2129 = vunpack.c.l.b16 %v1994
    %v2130 = vunpack.c.l.b16 %v1995
    %v2131 = vunpack.c.l.b16 %v1996
    %v2132 = vunpack.c.l.b16 %v1997
    %v2133 = vunpack.c.l.b16 %v1998
    %v2134 = vunpack.c.l.b16 %v1999
    %v2135 = vunpack.c.l.b16 %v2000
    %v2136 = vunpack.c.l.b16 %v2001
    %v2137 = vunpack.c.l.b16 %v2002
    %v2138 = vpack.c.b16 %v2075, %v2074
    %v2139 = vpack.c.b16 %v2077, %v2076
    %v2140 = vpack.c.b16 %v2079, %v2078
    %v2141 = vpack.c.b16 %v2081, %v2080
    %v2142 = vpack.c.b16 %v2083, %v2082
    %v2143 = vpack.c.b16 %v2085, %v2084
    %v2144 = vpack.c.b16 %v2087, %v2086
    %v2145 = vpack.c.b16 %v2089, %v2088
    %v2146 = vpack.c.b16 %v2091, %v2090
    %v2147 = vpack.c.b16 %v2093, %v2092
    %v2148 = vpack.c.b16 %v2095, %v2094
    %v2149 = vpack.c.b16 %v2097, %v2096
    %v2150 = vpack.c.b16 %v2099, %v2098
    %v2151 = vpack.c.b16 %v2101, %v2100
    %v2152 = vpack.c.b16 %v2103, %v2102
    %v2153 = vpack.c.b16 %v2105, %v2104
    %v2154 = vpack.c.b16 %v2107, %v2106
    %v2155 = vpack.c.b16 %v2109, %v2108
    %v2156 = vpack.c.b16 %v2111, %v2110
    %v2157 = vpack.c.b16 %v2113, %v2112
    %v2158 = vpack.c.b16 %v2115, %v2114
    %v2159 = vpack.c.b16 %v2117, %v2116
    %v2160 = vpack.c.b16 %v2119, %v2118
    %v2161 = vpack.c.b16 %v2121, %v2120
    %v2162 = vpack.c.b16 %v2123, %v2122
    %v2163 = vpack.c.b16 %v2125, %v2124
    %v2164 = vpack.c.b16 %v2127, %v2126
    %v2165 = vpack.c.b16 %v2129, %v2128
    %v2166 = vpack.c.b16 %v2131, %v2130
    %v2167 = vpack.c.b16 %v2133, %v2132
    %v2168 = vpack.c.b16 %v2135, %v2134
    %v2169 = vpack.c.b16 %v2137, %v2136
    %2202 = vmatprep.subr.bf16.mxu0 0
    %2203 = vmatpush1.bf16.msra.mxu0 %v2145
    %2204 = vmatprep.subr.bf16.mxu0 0
    %2205 = vmatpush1.bf16.msra.mxu0 %v2144
    %2206 = vmatprep.subr.bf16.mxu0 0
    %2207 = vmatpush1.bf16.msra.mxu0 %v2143
    %2208 = vmatprep.subr.bf16.mxu0 0
    %2209 = vmatpush1.bf16.msra.mxu0 %v2142
    %2210 = vmatprep.subr.bf16.mxu0 0
    %2211 = vmatpush1.bf16.msra.mxu0 %v2141
    %2212 = vmatprep.subr.bf16.mxu0 0
    %2213 = vmatpush1.bf16.msra.mxu0 %v2140
    %2214 = vmatprep.subr.bf16.mxu0 0
    %2215 = vmatpush1.bf16.msra.mxu0 %v2139
    %2216 = vmatprep.subr.bf16.mxu0 0
    %2217 = vmatpush1.bf16.msra.mxu0 %v2138
    %2218 = vmatprep.subr.bf16.mxu0 0
    %2219 = vmatpush2.bf16.msra.mxu0 %v2153
    %2220 = vmatprep.subr.bf16.mxu0 0
    %2221 = vmatpush2.bf16.msra.mxu0 %v2152
    %2222 = vmatprep.subr.bf16.mxu0 0
    %2223 = vmatpush2.bf16.msra.mxu0 %v2151
    %2224 = vmatprep.subr.bf16.mxu0 0
    %2225 = vmatpush2.bf16.msra.mxu0 %v2150
    %2226 = vmatprep.subr.bf16.mxu0 0
    %2227 = vmatpush2.bf16.msra.mxu0 %v2149
    %2228 = vmatprep.subr.bf16.mxu0 0
    %2229 = vmatpush2.bf16.msra.mxu0 %v2148
    %2230 = vmatprep.subr.bf16.mxu0 0
    %2231 = vmatpush2.bf16.msra.mxu0 %v2147
    %2232 = vmatprep.subr.bf16.mxu0 0
    %2233 = vmatpush2.bf16.msra.mxu0 %v2146
    %2234 = vmatprep.mubr.bf16.mxu0 %v1876
    %2235 = vmatmul.mubr.bf16.gmra.mxu0 %v1875
    %v2236 = vpop.f32.mrf.mxu0
    %v2237 = vadd.f32 %v2008, %v2236
    %v2238 = vpop.f32.mrf.mxu0
    %v2239 = vpop.f32.mrf.mxu0
    %v2240 = vadd.f32 %v2008, %v2239
    %v2241 = vpop.f32.mrf.mxu0
    %2242 = vmatprep.mubr.bf16.mxu0 %v1880
    %2243 = vmatmul.mubr.bf16.gmra.mxu0 %v1879
    %v2244 = vpop.f32.mrf.mxu0
    %v2245 = vadd.f32 %v2008, %v2244
    %v2246 = vpop.f32.mrf.mxu0
    %v2247 = vpop.f32.mrf.mxu0
    %v2248 = vadd.f32 %v2008, %v2247
    %v2249 = vpop.f32.mrf.mxu0
    %2250 = vmatprep.mubr.bf16.mxu0 %v1884
    %2251 = vmatmul.mubr.bf16.gmra.mxu0 %v1883
    %v2252 = vpop.f32.mrf.mxu0
    %v2253 = vadd.f32 %v2008, %v2252
    %v2254 = vpop.f32.mrf.mxu0
    %v2255 = vpop.f32.mrf.mxu0
    %v2256 = vadd.f32 %v2008, %v2255
    %v2257 = vpop.f32.mrf.mxu0
    %2258 = vmatprep.mubr.bf16.mxu0 %v1888
    %2259 = vmatmul.mubr.bf16.gmra.mxu0 %v1887
    %v2260 = vpop.f32.mrf.mxu0
    %v2261 = vadd.f32 %v2008, %v2260
    %v2262 = vpop.f32.mrf.mxu0
    %v2263 = vpop.f32.mrf.mxu0
    %v2264 = vadd.f32 %v2008, %v2263
    %v2265 = vpop.f32.mrf.mxu0
    %2266 = vmatprep.mubr.bf16.mxu0 %v1892
    %2267 = vmatmul.mubr.bf16.gmra.mxu0 %v1891
    %v2268 = vpop.f32.mrf.mxu0
    %v2269 = vadd.f32 %v2008, %v2268
    %v2270 = vpop.f32.mrf.mxu0
    %v2271 = vpop.f32.mrf.mxu0
    %v2272 = vadd.f32 %v2008, %v2271
    %v2273 = vpop.f32.mrf.mxu0
    %2274 = vmatprep.mubr.bf16.mxu0 %v1896
    %2275 = vmatmul.mubr.bf16.gmra.mxu0 %v1895
    %v2276 = vpop.f32.mrf.mxu0
    %v2277 = vadd.f32 %v2008, %v2276
    %v2278 = vpop.f32.mrf.mxu0
    %v2279 = vpop.f32.mrf.mxu0
    %v2280 = vadd.f32 %v2008, %v2279
    %v2281 = vpop.f32.mrf.mxu0
    %2282 = vmatprep.mubr.bf16.mxu0 %v1900
    %2283 = vmatmul.mubr.bf16.gmra.mxu0 %v1899
    %v2284 = vpop.f32.mrf.mxu0
    %v2285 = vadd.f32 %v2008, %v2284
    %v2286 = vpop.f32.mrf.mxu0
    %v2287 = vpop.f32.mrf.mxu0
    %v2288 = vadd.f32 %v2008, %v2287
    %v2289 = vpop.f32.mrf.mxu0
    %2290 = vmatprep.mubr.bf16.mxu0 %v1904
    %2291 = vmatmul.mubr.bf16.gmra.mxu0 %v1903
    %v2292 = vpop.f32.mrf.mxu0
    %v2293 = vadd.f32 %v2008, %v2292
    %v2294 = vpop.f32.mrf.mxu0
    %v2295 = vpop.f32.mrf.mxu0
    %v2296 = vadd.f32 %v2008, %v2295
    %v2297 = vpop.f32.mrf.mxu0
    %2298 = vmatprep.mubr.bf16.mxu0 %v1908
    %2299 = vmatmul.mubr.bf16.gmra.mxu0 %v1907
    %v2300 = vpop.f32.mrf.mxu0
    %v2301 = vadd.f32 %v2008, %v2300
    %v2302 = vpop.f32.mrf.mxu0
    %v2303 = vpop.f32.mrf.mxu0
    %v2304 = vadd.f32 %v2008, %v2303
    %v2305 = vpop.f32.mrf.mxu0
    %2306 = vmatprep.mubr.bf16.mxu0 %v1912
    %2307 = vmatmul.mubr.bf16.gmra.mxu0 %v1911
    %v2308 = vpop.f32.mrf.mxu0
    %v2309 = vadd.f32 %v2008, %v2308
    %v2310 = vpop.f32.mrf.mxu0
    %v2311 = vpop.f32.mrf.mxu0
    %v2312 = vadd.f32 %v2008, %v2311
    %v2313 = vpop.f32.mrf.mxu0
    %2314 = vmatprep.mubr.bf16.mxu0 %v1916
    %2315 = vmatmul.mubr.bf16.gmra.mxu0 %v1915
    %v2316 = vpop.f32.mrf.mxu0
    %v2317 = vadd.f32 %v2008, %v2316
    %v2318 = vpop.f32.mrf.mxu0
    %v2319 = vpop.f32.mrf.mxu0
    %v2320 = vadd.f32 %v2008, %v2319
    %v2321 = vpop.f32.mrf.mxu0
    %2322 = vmatprep.mubr.bf16.mxu0 %v1920
    %2323 = vmatmul.mubr.bf16.gmra.mxu0 %v1919
    %v2324 = vpop.f32.mrf.mxu0
    %v2325 = vadd.f32 %v2008, %v2324
    %v2326 = vpop.f32.mrf.mxu0
    %v2327 = vpop.f32.mrf.mxu0
    %v2328 = vadd.f32 %v2008, %v2327
    %v2329 = vpop.f32.mrf.mxu0
    %2330 = vmatprep.mubr.bf16.mxu0 %v1924
    %2331 = vmatmul.mubr.bf16.gmra.mxu0 %v1923
    %v2332 = vpop.f32.mrf.mxu0
    %v2333 = vadd.f32 %v2008, %v2332
    %v2334 = vpop.f32.mrf.mxu0
    %v2335 = vpop.f32.mrf.mxu0
    %v2336 = vadd.f32 %v2008, %v2335
    %v2337 = vpop.f32.mrf.mxu0
    %2338 = vmatprep.mubr.bf16.mxu0 %v1928
    %2339 = vmatmul.mubr.bf16.gmra.mxu0 %v1927
    %v2340 = vpop.f32.mrf.mxu0
    %v2341 = vadd.f32 %v2008, %v2340
    %v2342 = vpop.f32.mrf.mxu0
    %v2343 = vpop.f32.mrf.mxu0
    %v2344 = vadd.f32 %v2008, %v2343
    %v2345 = vpop.f32.mrf.mxu0
    %2346 = vmatprep.mubr.bf16.mxu0 %v1932
    %2347 = vmatmul.mubr.bf16.gmra.mxu0 %v1931
    %v2348 = vpop.f32.mrf.mxu0
    %v2349 = vadd.f32 %v2008, %v2348
    %v2350 = vpop.f32.mrf.mxu0
    %v2351 = vpop.f32.mrf.mxu0
    %v2352 = vadd.f32 %v2008, %v2351
    %v2353 = vpop.f32.mrf.mxu0
    %2354 = vmatprep.mubr.bf16.mxu0 %v1936
    %2355 = vmatmul.mubr.bf16.gmra.mxu0 %v1935
    %v2356 = vpop.f32.mrf.mxu0
    %v2357 = vadd.f32 %v2008, %v2356
    %v2358 = vpop.f32.mrf.mxu0
    %v2359 = vpop.f32.mrf.mxu0
    %v2360 = vadd.f32 %v2008, %v2359
    %v2361 = vpop.f32.mrf.mxu0
    %2362 = vdwg.mxu0
    %2363 = vmatprep.subr.bf16.mxu0 0
    %2364 = vmatpush1.bf16.msra.mxu0 %v2161
    %2365 = vmatprep.subr.bf16.mxu0 0
    %2366 = vmatpush1.bf16.msra.mxu0 %v2160
    %2367 = vmatprep.subr.bf16.mxu0 0
    %2368 = vmatpush1.bf16.msra.mxu0 %v2159
    %2369 = vmatprep.subr.bf16.mxu0 0
    %2370 = vmatpush1.bf16.msra.mxu0 %v2158
    %2371 = vmatprep.subr.bf16.mxu0 0
    %2372 = vmatpush1.bf16.msra.mxu0 %v2157
    %2373 = vmatprep.subr.bf16.mxu0 0
    %2374 = vmatpush1.bf16.msra.mxu0 %v2156
    %2375 = vmatprep.subr.bf16.mxu0 0
    %2376 = vmatpush1.bf16.msra.mxu0 %v2155
    %2377 = vmatprep.subr.bf16.mxu0 0
    %2378 = vmatpush1.bf16.msra.mxu0 %v2154
    %2379 = vmatprep.subr.bf16.mxu0 0
    %2380 = vmatpush2.bf16.msra.mxu0 %v2169
    %2381 = vmatprep.subr.bf16.mxu0 0
    %2382 = vmatpush2.bf16.msra.mxu0 %v2168
    %2383 = vmatprep.subr.bf16.mxu0 0
    %2384 = vmatpush2.bf16.msra.mxu0 %v2167
    %2385 = vmatprep.subr.bf16.mxu0 0
    %2386 = vmatpush2.bf16.msra.mxu0 %v2166
    %2387 = vmatprep.subr.bf16.mxu0 0
    %2388 = vmatpush2.bf16.msra.mxu0 %v2165
    %2389 = vmatprep.subr.bf16.mxu0 0
    %2390 = vmatpush2.bf16.msra.mxu0 %v2164
    %2391 = vmatprep.subr.bf16.mxu0 0
    %2392 = vmatpush2.bf16.msra.mxu0 %v2163
    %2393 = vmatprep.subr.bf16.mxu0 0
    %2394 = vmatpush2.bf16.msra.mxu0 %v2162
    %2395 = vmatprep.mubr.bf16.mxu0 %v1878
    %2396 = vmatmul.mubr.bf16.gmra.mxu0 %v1877
    %v2397 = vpop.f32.mrf.mxu0
    %v2398 = vadd.f32 %v2237, %v2397
    %v2399 = vpop.f32.mrf.mxu0
    %v2400 = vpop.f32.mrf.mxu0
    %v2401 = vadd.f32 %v2240, %v2400
    %v2402 = vpop.f32.mrf.mxu0
    %2403 = vmatprep.mubr.bf16.mxu0 %v1882
    %2404 = vmatmul.mubr.bf16.gmra.mxu0 %v1881
    %v2405 = vpop.f32.mrf.mxu0
    %v2406 = vadd.f32 %v2245, %v2405
    %v2407 = vpop.f32.mrf.mxu0
    %v2408 = vpop.f32.mrf.mxu0
    %v2409 = vadd.f32 %v2248, %v2408
    %v2410 = vpop.f32.mrf.mxu0
    %2411 = vmatprep.mubr.bf16.mxu0 %v1886
    %2412 = vmatmul.mubr.bf16.gmra.mxu0 %v1885
    %v2413 = vpop.f32.mrf.mxu0
    %v2414 = vadd.f32 %v2253, %v2413
    %v2415 = vpop.f32.mrf.mxu0
    %v2416 = vpop.f32.mrf.mxu0
    %v2417 = vadd.f32 %v2256, %v2416
    %v2418 = vpop.f32.mrf.mxu0
    %2419 = vmatprep.mubr.bf16.mxu0 %v1890
    %2420 = vmatmul.mubr.bf16.gmra.mxu0 %v1889
    %v2421 = vpop.f32.mrf.mxu0
    %v2422 = vadd.f32 %v2261, %v2421
    %v2423 = vpop.f32.mrf.mxu0
    %v2424 = vpop.f32.mrf.mxu0
    %v2425 = vadd.f32 %v2264, %v2424
    %v2426 = vpop.f32.mrf.mxu0
    %2427 = vmatprep.mubr.bf16.mxu0 %v1894
    %2428 = vmatmul.mubr.bf16.gmra.mxu0 %v1893
    %v2429 = vpop.f32.mrf.mxu0
    %v2430 = vadd.f32 %v2269, %v2429
    %v2431 = vpop.f32.mrf.mxu0
    %v2432 = vpop.f32.mrf.mxu0
    %v2433 = vadd.f32 %v2272, %v2432
    %v2434 = vpop.f32.mrf.mxu0
    %2435 = vmatprep.mubr.bf16.mxu0 %v1898
    %2436 = vmatmul.mubr.bf16.gmra.mxu0 %v1897
    %v2437 = vpop.f32.mrf.mxu0
    %v2438 = vadd.f32 %v2277, %v2437
    %v2439 = vpop.f32.mrf.mxu0
    %v2440 = vpop.f32.mrf.mxu0
    %v2441 = vadd.f32 %v2280, %v2440
    %v2442 = vpop.f32.mrf.mxu0
    %2443 = vmatprep.mubr.bf16.mxu0 %v1902
    %2444 = vmatmul.mubr.bf16.gmra.mxu0 %v1901
    %v2445 = vpop.f32.mrf.mxu0
    %v2446 = vadd.f32 %v2285, %v2445
    %v2447 = vpop.f32.mrf.mxu0
    %v2448 = vpop.f32.mrf.mxu0
    %v2449 = vadd.f32 %v2288, %v2448
    %v2450 = vpop.f32.mrf.mxu0
    %2451 = vmatprep.mubr.bf16.mxu0 %v1906
    %2452 = vmatmul.mubr.bf16.gmra.mxu0 %v1905
    %v2453 = vpop.f32.mrf.mxu0
    %v2454 = vadd.f32 %v2293, %v2453
    %v2455 = vpop.f32.mrf.mxu0
    %v2456 = vpop.f32.mrf.mxu0
    %v2457 = vadd.f32 %v2296, %v2456
    %v2458 = vpop.f32.mrf.mxu0
    %2459 = vmatprep.mubr.bf16.mxu0 %v1910
    %2460 = vmatmul.mubr.bf16.gmra.mxu0 %v1909
    %v2461 = vpop.f32.mrf.mxu0
    %v2462 = vadd.f32 %v2301, %v2461
    %v2463 = vpop.f32.mrf.mxu0
    %v2464 = vpop.f32.mrf.mxu0
    %v2465 = vadd.f32 %v2304, %v2464
    %v2466 = vpop.f32.mrf.mxu0
    %2467 = vmatprep.mubr.bf16.mxu0 %v1914
    %2468 = vmatmul.mubr.bf16.gmra.mxu0 %v1913
    %v2469 = vpop.f32.mrf.mxu0
    %v2470 = vadd.f32 %v2309, %v2469
    %v2471 = vpop.f32.mrf.mxu0
    %v2472 = vpop.f32.mrf.mxu0
    %v2473 = vadd.f32 %v2312, %v2472
    %v2474 = vpop.f32.mrf.mxu0
    %2475 = vmatprep.mubr.bf16.mxu0 %v1918
    %2476 = vmatmul.mubr.bf16.gmra.mxu0 %v1917
    %v2477 = vpop.f32.mrf.mxu0
    %v2478 = vadd.f32 %v2317, %v2477
    %v2479 = vpop.f32.mrf.mxu0
    %v2480 = vpop.f32.mrf.mxu0
    %v2481 = vadd.f32 %v2320, %v2480
    %v2482 = vpop.f32.mrf.mxu0
    %2483 = vmatprep.mubr.bf16.mxu0 %v1922
    %2484 = vmatmul.mubr.bf16.gmra.mxu0 %v1921
    %v2485 = vpop.f32.mrf.mxu0
    %v2486 = vadd.f32 %v2325, %v2485
    %v2487 = vpop.f32.mrf.mxu0
    %v2488 = vpop.f32.mrf.mxu0
    %v2489 = vadd.f32 %v2328, %v2488
    %v2490 = vpop.f32.mrf.mxu0
    %2491 = vmatprep.mubr.bf16.mxu0 %v1926
    %2492 = vmatmul.mubr.bf16.gmra.mxu0 %v1925
    %v2493 = vpop.f32.mrf.mxu0
    %v2494 = vadd.f32 %v2333, %v2493
    %v2495 = vpop.f32.mrf.mxu0
    %v2496 = vpop.f32.mrf.mxu0
    %v2497 = vadd.f32 %v2336, %v2496
    %v2498 = vpop.f32.mrf.mxu0
    %2499 = vmatprep.mubr.bf16.mxu0 %v1930
    %2500 = vmatmul.mubr.bf16.gmra.mxu0 %v1929
    %v2501 = vpop.f32.mrf.mxu0
    %v2502 = vadd.f32 %v2341, %v2501
    %v2503 = vpop.f32.mrf.mxu0
    %v2504 = vpop.f32.mrf.mxu0
    %v2505 = vadd.f32 %v2344, %v2504
    %v2506 = vpop.f32.mrf.mxu0
    %2507 = vmatprep.mubr.bf16.mxu0 %v1934
    %2508 = vmatmul.mubr.bf16.gmra.mxu0 %v1933
    %v2509 = vpop.f32.mrf.mxu0
    %v2510 = vadd.f32 %v2349, %v2509
    %v2511 = vpop.f32.mrf.mxu0
    %v2512 = vpop.f32.mrf.mxu0
    %v2513 = vadd.f32 %v2352, %v2512
    %v2514 = vpop.f32.mrf.mxu0
    %2515 = vmatprep.mubr.bf16.mxu0 %v1938
    %2516 = vmatmul.mubr.bf16.gmra.mxu0 %v1937
    %v2517 = vpop.f32.mrf.mxu0
    %v2518 = vadd.f32 %v2357, %v2517
    %v2519 = vpop.f32.mrf.mxu0
    %v2520 = vpop.f32.mrf.mxu0
    %v2521 = vadd.f32 %v2360, %v2520
    %v2522 = vpop.f32.mrf.mxu0
    %2523 = vdwg.mxu0
    %2524 = vst [vmem:[#allocation10] sm:$0xff] %v2398
    %2525 = vst [vmem:[#allocation10 + $0x8] sm:$0xff] %v2401
    %2526 = vst [vmem:[#allocation10 + $0x10] sm:$0xff] %v2406
    %2527 = vst [vmem:[#allocation10 + $0x18] sm:$0xff] %v2409
    %2528 = vst [vmem:[#allocation10 + $0x20] sm:$0xff] %v2414
    %2529 = vst [vmem:[#allocation10 + $0x28] sm:$0xff] %v2417
    %2530 = vst [vmem:[#allocation10 + $0x30] sm:$0xff] %v2422
    %2531 = vst [vmem:[#allocation10 + $0x38] sm:$0xff] %v2425
    %2532 = vst [vmem:[#allocation10 + $0x40] sm:$0xff] %v2430
    %2533 = vst [vmem:[#allocation10 + $0x48] sm:$0xff] %v2433
    %2534 = vst [vmem:[#allocation10 + $0x50] sm:$0xff] %v2438
    %2535 = vst [vmem:[#allocation10 + $0x58] sm:$0xff] %v2441
    %2536 = vst [vmem:[#allocation10 + $0x60] sm:$0xff] %v2446
    %2537 = vst [vmem:[#allocation10 + $0x68] sm:$0xff] %v2449
    %2538 = vst [vmem:[#allocation10 + $0x70] sm:$0xff] %v2454
    %2539 = vst [vmem:[#allocation10 + $0x78] sm:$0xff] %v2457
    %2540 = vst [vmem:[#allocation10 + $0x80] sm:$0xff] %v2462
    %2541 = vst [vmem:[#allocation10 + $0x88] sm:$0xff] %v2465
    %2542 = vst [vmem:[#allocation10 + $0x90] sm:$0xff] %v2470
    %2543 = vst [vmem:[#allocation10 + $0x98] sm:$0xff] %v2473
    %2544 = vst [vmem:[#allocation10 + $0xa0] sm:$0xff] %v2478
    %2545 = vst [vmem:[#allocation10 + $0xa8] sm:$0xff] %v2481
    %2546 = vst [vmem:[#allocation10 + $0xb0] sm:$0xff] %v2486
    %2547 = vst [vmem:[#allocation10 + $0xb8] sm:$0xff] %v2489
    %2548 = vst [vmem:[#allocation10 + $0xc0] sm:$0xff] %v2494
    %2549 = vst [vmem:[#allocation10 + $0xc8] sm:$0xff] %v2497
    %2550 = vst [vmem:[#allocation10 + $0xd0] sm:$0xff] %v2502
    %2551 = vst [vmem:[#allocation10 + $0xd8] sm:$0xff] %v2505
    %2552 = vst [vmem:[#allocation10 + $0xe0] sm:$0xff] %v2510
    %2553 = vst [vmem:[#allocation10 + $0xe8] sm:$0xff] %v2513
    %2554 = vst [vmem:[#allocation10 + $0xf0] sm:$0xff] %v2518
    %2555 = vst [vmem:[#allocation10 + $0xf8] sm:$0xff] %v2521
    // Predicated region
    $region38: #{tpu_custom_call.1} parent=1 // pred_check
      _
    $region39: #{tpu_custom_call.1} parent=1 // pred_check_branch
      %2557 = sbr.rel (0) target = $region41
    $region40: #{tpu_custom_call.1} parent=1 // pred_region
      %s2559 = ssub.s32 4096, 4096
      %2560 = vsyncadd [#allocation4], %s2559
      %s2561 = sshll.u32 [#allocation10], 4
      %s2562 = int_to_ptr.vmem [resolvable:$true] %s2561
      %2567 = dma.vmem_to_hbm [thread:$0]  %s2562, 4096, %s5, [#allocation4], 128, 128, 8
    $region41: #{tpu_custom_call.1} parent=1 // pred_fallthru
      _
    // Predicated region
    $region42: #{tpu_custom_call.1} parent=1 // pred_check
      _
    $region43: #{tpu_custom_call.1} parent=1 // pred_check_branch
      %2569 = sbr.rel (0) target = $region45
    $region44: #{tpu_custom_call.1} parent=1 // pred_region
      %2570 = dma.done [#allocation4], 4096
    $region45: #{tpu_custom_call.1} parent=1 // pred_fallthru
      _
    %2571 = vsyncpa [#allocation3], 1
    %2572 = vsyncpa [#allocation6], 1
    %2573 = vsyncpa [#allocation9], 1
    %2574 = vsyncpa [#allocation4], 1

</llo_original>
